<compile_context>
chip_gen: v5e
topology: v5e:2x2
jax: 0.10.0
libtpu: 0.0.40
codegen_flags: <defaults>
</compile_context>

<pallas_src>
import functools

import numpy as np
import jax
import jax.numpy as jnp
from jax.experimental import pallas as pl
from jax.experimental.pallas import tpu as pltpu


# ---------------------------------------------------------------------------
# helpers
# ---------------------------------------------------------------------------
def _layer_norm(z, w, b, eps=1e-5):
    mu = jnp.mean(z, axis=-1, keepdims=True)
    zc = z - mu
    var = jnp.mean(zc * zc, axis=-1, keepdims=True)
    return zc * jax.lax.rsqrt(var + eps) * w + b


# ---------------------------------------------------------------------------
# Fused kernel: attention + mask/fix + LN1 + FFN + LN2 (per batch element)
# ---------------------------------------------------------------------------
def _fused_kernel(*refs, num_heads, use_mask, use_fix):
    it = iter(refs)
    tgt_ref = next(it)
    src_ref = next(it)
    mask_ref = next(it) if use_mask else None
    fix_ref = next(it) if use_fix else None
    (wq_ref, wk_ref, wv_ref, bq_ref, bk_ref, bv_ref, wo_ref, bo_ref,
     ln1w_ref, ln1b_ref, w1_ref, b1_ref, w2_ref, b2_ref,
     ln2w_ref, ln2b_ref, out_ref, attn_w_ref) = tuple(it)

    x0 = tgt_ref[0]                                   # (T, E) f32 original tgt
    s0 = src_ref[0]                                   # (S, E) f32 src
    T, E = x0.shape
    S = s0.shape[0]
    H = num_heads
    hd = E // H
    cdt = wq_ref.dtype        # MXU compute dtype (bf16 by default, f32 accum)

    # --- QKV projections (1/sqrt(hd) already folded into wq/bq host-side) ---
    xb = x0.astype(cdt)
    sb = s0.astype(cdt)
    q = jnp.dot(xb, wq_ref[...], preferred_element_type=jnp.float32) + bq_ref[...]
    k = jnp.dot(sb, wk_ref[...], preferred_element_type=jnp.float32) + bk_ref[...]
    v = jnp.dot(sb, wv_ref[...], preferred_element_type=jnp.float32) + bv_ref[...]

    # --- head-batched attention: one up-front relayout, no per-head slicing --
    q3 = q.reshape(T, H, hd).astype(cdt)              # (T, H, hd)
    k3 = k.reshape(S, H, hd).astype(cdt)              # (S, H, hd)
    v3 = v.reshape(S, H, hd).astype(cdt)
    sc = jnp.einsum("thd,shd->hts", q3, k3,
                    preferred_element_type=jnp.float32)          # (H, T, S)
    mx = jnp.max(sc, axis=-1, keepdims=True)
    p = jnp.exp(sc - mx)
    denom = jnp.sum(p, axis=-1, keepdims=True)
    p = p * pl.reciprocal(denom, approx=True)         # EUP slot, off VALU path

    ctx = jnp.einsum("hts,shd->thd", p.astype(cdt), v3,
                     preferred_element_type=jnp.float32)          # (T, H, hd)
    # single fused output projection: (T,E) @ (E,E)
    attn_out = jnp.dot(ctx.reshape(T, E).astype(cdt), wo_ref[...],
                       preferred_element_type=jnp.float32) + bo_ref[...]

    # --- head-averaged attention weights, lane-dense (padded) writeback ------
    pw = jnp.mean(p, axis=0)                          # (T, S)
    s_pad = attn_w_ref.shape[-1]
    if s_pad > S:
        pw = jnp.concatenate(
            [pw, jnp.zeros((T, s_pad - S), pw.dtype)], axis=-1)
    attn_w_ref[0] = pw.astype(attn_w_ref.dtype)

    # --- mask / fix restore, LN1, FFN, LN2 (fused: no attn_out HBM trip) -----
    m = mask_ref[0] if use_mask else None             # (T, 1) 0/1
    fx = (fix_ref[0] != 0.0) if use_fix else None     # (T, 1) bool

    a = attn_out
    if use_mask:
        a = a * m                                     # masked_fill(~mask, 0)
    if use_fix:
        a = jnp.where(fx, x0, a)                      # attn_out[fix] = tgt_start
    t = _layer_norm(x0 + a, ln1w_ref[...], ln1b_ref[...])
    if use_mask:
        t = t * m
    if use_fix:
        t = jnp.where(fx, x0, t)

    # FFN (dropout is train-only in the reference; eval forward skips it)
    h = jnp.maximum(
        jnp.dot(t.astype(cdt), w1_ref[...],
                preferred_element_type=jnp.float32) + b1_ref[...], 0.0)
    o = jnp.dot(h.astype(cdt), w2_ref[...],
                preferred_element_type=jnp.float32) + b2_ref[...]
    o = _layer_norm(t + o, ln2w_ref[...], ln2b_ref[...])
    if use_mask:
        o = o * m
    if use_fix:
        o = jnp.where(fx, t, o)                       # FFN's x_start is its input t
    out_ref[0] = o.astype(out_ref.dtype)


# ---------------------------------------------------------------------------
# Wrapper
# ---------------------------------------------------------------------------
def cross_attention_encoder_forward(tgt, src, params, tgt_mask=None,
                                    src_mask=None, fix_mask=None, num_heads=4,
                                    compute_dtype=jnp.bfloat16):
    """tgt: (B, T, E), src: (B, S, E) float32.
    tgt_mask: (B, T, 1) 0/1 (or bool) or None.  fix_mask: (B, T, 1) bool or None.
    Returns (output (B, T, E), attn_weights (B, T, S))."""
    # TODO(synk): the torch module builds attn_mask from tgt_mask/src_mask but
    # never passes it to nn.MultiheadAttention, so src_mask has no effect on
    # the output; it is accepted for signature parity and ignored.
    del src_mask

    B, T, E = tgt.shape
    S = src.shape[1]
    F = params["w1"].shape[1]
    assert E % num_heads == 0, "d_model must be divisible by num_heads"
    hd = E // num_heads
    scale = 1.0 / float(np.sqrt(hd))
    cdt = jnp.dtype(compute_dtype)

    tgt = tgt.astype(jnp.float32)
    src = src.astype(jnp.float32)

    # Fold softmax scale into the Q projection; pre-cast matmul weights to the
    # MXU compute dtype.  Biases / LN params stay f32 (added after f32 accum).
    wq = (params["wq"] * scale).astype(cdt)
    bq = (params["bq"] * scale).astype(jnp.float32)
    wk = params["wk"].astype(cdt)
    wv = params["wv"].astype(cdt)
    wo = params["wo"].astype(cdt)
    w1 = params["w1"].astype(cdt)
    w2 = params["w2"].astype(cdt)
    bk = params["bk"].astype(jnp.float32)
    bv = params["bv"].astype(jnp.float32)
    bo = params["bo"].astype(jnp.float32)
    ln1w = params["ln1w"].astype(jnp.float32)
    ln1b = params["ln1b"].astype(jnp.float32)
    b1 = params["b1"].astype(jnp.float32)
    b2 = params["b2"].astype(jnp.float32)
    ln2w = params["ln2w"].astype(jnp.float32)
    ln2b = params["ln2b"].astype(jnp.float32)

    use_mask = tgt_mask is not None
    use_fix = fix_mask is not None

    # Lane-dense attn_w writeback: pad S up to a multiple of 128, slice on host.
    s_pad = ((S + 127) // 128) * 128

    def bspec3(shp):
        return pl.BlockSpec(shp, lambda b: (b, 0, 0))

    def wspec(shp):
        return pl.BlockSpec(shp, lambda b: (0, 0))

    in_specs = [bspec3((1, T, E)), bspec3((1, S, E))]
    args = [tgt, src]
    if use_mask:
        in_specs.append(bspec3((1, T, 1)))
        args.append(jnp.broadcast_to(tgt_mask, (B, T, 1)).astype(jnp.float32))
    if use_fix:
        in_specs.append(bspec3((1, T, 1)))
        args.append(jnp.broadcast_to(fix_mask, (B, T, 1)).astype(jnp.float32))
    # TODO(synk): weights have constant index_maps; pipeline_mode=pl.Buffered(1)
    # would halve their VMEM footprint for large E/F (negligible at E=128).
    in_specs += [wspec((E, E)), wspec((E, E)), wspec((E, E)),
                 wspec((1, E)), wspec((1, E)), wspec((1, E)),
                 wspec((E, E)), wspec((1, E)),
                 wspec((1, E)), wspec((1, E)),
                 wspec((E, F)), wspec((1, F)),
                 wspec((F, E)), wspec((1, E)),
                 wspec((1, E)), wspec((1, E))]
    args += [wq, wk, wv, bq, bk, bv, wo, bo,
             ln1w, ln1b, w1, b1, w2, b2, ln2w, ln2b]

    flops = int(B * (2 * T * E * E + 4 * S * E * E + 4 * T * S * E
                     + 2 * T * E * E + 4 * T * E * F))
    bytes_accessed = int(
        4 * B * (2 * T * E + S * E + T * s_pad + 2 * T)
        + cdt.itemsize * (4 * E * E + 2 * E * F) + 4 * (8 * E + F))

    out, attn_w_pad = pl.pallas_call(
        functools.partial(_fused_kernel, num_heads=num_heads,
                          use_mask=use_mask, use_fix=use_fix),
        out_shape=(jax.ShapeDtypeStruct((B, T, E), jnp.float32),
                   jax.ShapeDtypeStruct((B, T, s_pad), jnp.float32)),
        grid_spec=pltpu.PrefetchScalarGridSpec(
            num_scalar_prefetch=0,
            grid=(B,),
            in_specs=in_specs,
            out_specs=[bspec3((1, T, E)), bspec3((1, T, s_pad))],
        ),
        compiler_params=pltpu.CompilerParams(
            dimension_semantics=("parallel",)),
        cost_estimate=pl.CostEstimate(
            flops=flops,
            transcendentals=int(B * (num_heads * T * S + 4 * T)),
            bytes_accessed=bytes_accessed),
    )(*args)

    attn_w = attn_w_pad if s_pad == S else attn_w_pad[..., :S]
    return out, attn_w


# ---------------------------------------------------------------------------
# Pure-JAX reference (mirrors the PyTorch forward, eval mode)
# ---------------------------------------------------------------------------
def reference_forward(tgt, src, params, tgt_mask=None, fix_mask=None,
                      num_heads=4):
    P = jax.lax.Precision.HIGHEST
    B, T, E = tgt.shape
    S = src.shape[1]
    hd = E // num_heads

    q = jnp.einsum("bte,ef->btf", tgt, params["wq"], precision=P) + params["bq"]
    k = jnp.einsum("bse,ef->bsf", src, params["wk"], precision=P) + params["bk"]
    v = jnp.einsum("bse,ef->bsf", src, params["wv"], precision=P) + params["bv"]
    qh = q.reshape(B, T, num_heads, hd).transpose(0, 2, 1, 3)
    kh = k.reshape(B, S, num_heads, hd).transpose(0, 2, 1, 3)
    vh = v.reshape(B, S, num_heads, hd).transpose(0, 2, 1, 3)
    sc = jnp.einsum("bhtd,bhsd->bhts", qh, kh, precision=P) / np.sqrt(hd)
    p = jax.nn.softmax(sc, axis=-1)
    attn_w = jnp.mean(p, axis=1)                               # (B, T, S)
    ctx = jnp.einsum("bhts,bhsd->bhtd", p, vh, precision=P)
    ctx = ctx.transpose(0, 2, 1, 3).reshape(B, T, E)
    attn_out = jnp.einsum("bte,ef->btf", ctx, params["wo"], precision=P) \
        + params["bo"]

    def ln(z, w, b):
        mu = jnp.mean(z, -1, keepdims=True)
        var = jnp.mean((z - mu) ** 2, -1, keepdims=True)
        return (z - mu) * jax.lax.rsqrt(var + 1e-5) * w + b

    tgt_start = tgt
    fm = None if fix_mask is None else jnp.broadcast_to(
        fix_mask.astype(bool), tgt.shape)
    if tgt_mask is not None:
        attn_out = attn_out * tgt_mask
    if fm is not None:
        attn_out = jnp.where(fm, tgt_start, attn_out)
    t = ln(tgt + attn_out, params["ln1w"], params["ln1b"])
    if tgt_mask is not None:
        t = t * tgt_mask
    if fm is not None:
        t = jnp.where(fm, tgt_start, t)
    h = jnp.maximum(
        jnp.einsum("bte,ef->btf", t, params["w1"], precision=P) + params["b1"],
        0.0)
    o = jnp.einsum("btf,fe->bte", h, params["w2"], precision=P) + params["b2"]
    o = ln(t + o, params["ln2w"], params["ln2b"])
    if tgt_mask is not None:
        o = o * tgt_mask
    if fm is not None:
        o = jnp.where(fm, t, o)
    return o, attn_w


# ---------------------------------------------------------------------------
# Demo / test
# ---------------------------------------------------------------------------
if __name__ == "__main__":
    key = jax.random.PRNGKey(0)
    ks = jax.random.split(key, 20)

    B, T, S = 2, 16, 32
    E, H, F = 128, 4, 256        # d_model, num_heads, dim_feedforward

    def uni(k, shape, lim):
        return jax.random.uniform(k, shape, jnp.float32, -lim, lim)

    lim_e = 1.0 / float(np.sqrt(E))
    lim_f = 1.0 / float(np.sqrt(F))
    params = dict(
        wq=uni(ks[0], (E, E), lim_e), bq=uni(ks[1], (1, E), lim_e),
        wk=uni(ks[2], (E, E), lim_e), bk=uni(ks[3], (1, E), lim_e),
        wv=uni(ks[4], (E, E), lim_e), bv=uni(ks[5], (1, E), lim_e),
        wo=uni(ks[6], (E, E), lim_e), bo=uni(ks[7], (1, E), lim_e),
        ln1w=1.0 + 0.1 * jax.random.normal(ks[8], (1, E), jnp.float32),
        ln1b=0.1 * jax.random.normal(ks[9], (1, E), jnp.float32),
        w1=uni(ks[10], (E, F), lim_e), b1=uni(ks[11], (1, F), lim_e),
        w2=uni(ks[12], (F, E), lim_f), b2=uni(ks[13], (1, E), lim_f),
        ln2w=1.0 + 0.1 * jax.random.normal(ks[14], (1, E), jnp.float32),
        ln2b=0.1 * jax.random.normal(ks[15], (1, E), jnp.float32),
    )

    tgt = jax.random.normal(ks[16], (B, T, E), jnp.float32)
    src = jax.random.normal(ks[17], (B, S, E), jnp.float32)
    tgt_mask = (jax.random.uniform(ks[18], (B, T, 1)) > 0.25).astype(jnp.float32)
    fix_mask = jax.random.uniform(ks[19], (B, T, 1)) > 0.7       # bool

    ref_m, refw_m = reference_forward(tgt, src, params, tgt_mask=tgt_mask,
                                      fix_mask=fix_mask, num_heads=H)
    ref_n, refw_n = reference_forward(tgt, src, params, num_heads=H)

    ok = True

    # Case 1: masks, f32 MXU path (tight numerical check of kernel structure)
    out1, aw1 = cross_attention_encoder_forward(
        tgt, src, params, tgt_mask=tgt_mask, fix_mask=fix_mask, num_heads=H,
        compute_dtype=jnp.float32)
    out1 = jax.block_until_ready(out1)
    ok &= np.allclose(np.asarray(out1), np.asarray(ref_m), atol=2e-3, rtol=2e-3)
    ok &= np.allclose(np.asarray(aw1), np.asarray(refw_m), atol=2e-3, rtol=1e-2)

    # Case 2: no masks at all (different kernel signature / specs), f32 path
    out2, aw2 = cross_attention_encoder_forward(
        tgt, src, params, num_heads=H, compute_dtype=jnp.float32)
    out2 = jax.block_until_ready(out2)
    ok &= np.allclose(np.asarray(out2), np.asarray(ref_n), atol=2e-3, rtol=2e-3)
    ok &= np.allclose(np.asarray(aw2), np.asarray(refw_n), atol=2e-3, rtol=1e-2)

    # Case 3: masks, default bf16 MXU path (bf16 operands, f32 accumulation)
    out3, aw3 = cross_attention_encoder_forward(
        tgt, src, params, tgt_mask=tgt_mask, fix_mask=fix_mask, num_heads=H)
    out3 = jax.block_until_ready(out3)
    ok &= np.allclose(np.asarray(out3), np.asarray(ref_m), atol=2.5e-2, rtol=2.5e-2)
    ok &= np.allclose(np.asarray(aw3), np.asarray(refw_m), atol=5e-3, rtol=2e-2)

    if ok:
        print("KERNEL_OK")
    else:
        raise SystemExit("mismatch between Pallas kernel and reference")
</pallas_src>

<mosaic_0001>
module attributes {stable_mosaic.version = 11 : i64} {
  func.func @_fused_kernel(%arg0: i32, %arg1: memref<1x16x128xf32, #tpu.memory_space<vmem>>, %arg2: memref<1x32x128xf32, #tpu.memory_space<vmem>>, %arg3: memref<1x16x1xf32, #tpu.memory_space<vmem>>, %arg4: memref<1x16x1xf32, #tpu.memory_space<vmem>>, %arg5: memref<128x128xf32, #tpu.memory_space<vmem>>, %arg6: memref<128x128xf32, #tpu.memory_space<vmem>>, %arg7: memref<128x128xf32, #tpu.memory_space<vmem>>, %arg8: memref<1x128xf32, #tpu.memory_space<vmem>>, %arg9: memref<1x128xf32, #tpu.memory_space<vmem>>, %arg10: memref<1x128xf32, #tpu.memory_space<vmem>>, %arg11: memref<128x128xf32, #tpu.memory_space<vmem>>, %arg12: memref<1x128xf32, #tpu.memory_space<vmem>>, %arg13: memref<1x128xf32, #tpu.memory_space<vmem>>, %arg14: memref<1x128xf32, #tpu.memory_space<vmem>>, %arg15: memref<128x256xf32, #tpu.memory_space<vmem>>, %arg16: memref<1x256xf32, #tpu.memory_space<vmem>>, %arg17: memref<256x128xf32, #tpu.memory_space<vmem>>, %arg18: memref<1x128xf32, #tpu.memory_space<vmem>>, %arg19: memref<1x128xf32, #tpu.memory_space<vmem>>, %arg20: memref<1x128xf32, #tpu.memory_space<vmem>>, %arg21: memref<1x16x128xf32, #tpu.memory_space<vmem>>, %arg22: memref<1x16x128xf32, #tpu.memory_space<vmem>>) attributes {dimension_semantics = [#tpu.dimension_semantics<parallel>], iteration_bounds = array<i64: 2>, scalar_prefetch = 0 : i64, scratch_operands = 0 : i64, tpu.core_type = #tpu.core_type<tc>, window_params = [{transform_indices = @transform_0, window_bounds = array<i64: 1, 16, 128>}, {transform_indices = @transform_1, window_bounds = array<i64: 1, 32, 128>}, {transform_indices = @transform_2, window_bounds = array<i64: 1, 16, 1>}, {transform_indices = @transform_3, window_bounds = array<i64: 1, 16, 1>}, {pipeline_mode = #tpu.pipeline_mode<synchronous>, transform_indices = @transform_4, window_bounds = array<i64: 128, 128>}, {pipeline_mode = #tpu.pipeline_mode<synchronous>, transform_indices = @transform_5, window_bounds = array<i64: 128, 128>}, {pipeline_mode = #tpu.pipeline_mode<synchronous>, transform_indices = @transform_6, window_bounds = array<i64: 128, 128>}, {pipeline_mode = #tpu.pipeline_mode<synchronous>, transform_indices = @transform_7, window_bounds = array<i64: 1, 128>}, {pipeline_mode = #tpu.pipeline_mode<synchronous>, transform_indices = @transform_8, window_bounds = array<i64: 1, 128>}, {pipeline_mode = #tpu.pipeline_mode<synchronous>, transform_indices = @transform_9, window_bounds = array<i64: 1, 128>}, {pipeline_mode = #tpu.pipeline_mode<synchronous>, transform_indices = @transform_10, window_bounds = array<i64: 128, 128>}, {pipeline_mode = #tpu.pipeline_mode<synchronous>, transform_indices = @transform_11, window_bounds = array<i64: 1, 128>}, {pipeline_mode = #tpu.pipeline_mode<synchronous>, transform_indices = @transform_12, window_bounds = array<i64: 1, 128>}, {pipeline_mode = #tpu.pipeline_mode<synchronous>, transform_indices = @transform_13, window_bounds = array<i64: 1, 128>}, {pipeline_mode = #tpu.pipeline_mode<synchronous>, transform_indices = @transform_14, window_bounds = array<i64: 128, 256>}, {pipeline_mode = #tpu.pipeline_mode<synchronous>, transform_indices = @transform_15, window_bounds = array<i64: 1, 256>}, {pipeline_mode = #tpu.pipeline_mode<synchronous>, transform_indices = @transform_16, window_bounds = array<i64: 256, 128>}, {pipeline_mode = #tpu.pipeline_mode<synchronous>, transform_indices = @transform_17, window_bounds = array<i64: 1, 128>}, {pipeline_mode = #tpu.pipeline_mode<synchronous>, transform_indices = @transform_18, window_bounds = array<i64: 1, 128>}, {pipeline_mode = #tpu.pipeline_mode<synchronous>, transform_indices = @transform_19, window_bounds = array<i64: 1, 128>}, {transform_indices = @transform_20, window_bounds = array<i64: 1, 16, 128>}, {transform_indices = @transform_21, window_bounds = array<i64: 1, 16, 128>}]} {
    %c0 = arith.constant 0 : index
    %c0_0 = arith.constant 0 : index
    %c0_1 = arith.constant 0 : index
    %0 = vector.load %arg1[%c0, %c0_0, %c0_1] : memref<1x16x128xf32, #tpu.memory_space<vmem>>, vector<1x16x128xf32>
    %1 = vector.shape_cast %0 : vector<1x16x128xf32> to vector<16x128xf32>
    %c0_2 = arith.constant 0 : index
    %c0_3 = arith.constant 0 : index
    %c0_4 = arith.constant 0 : index
    %2 = vector.load %arg2[%c0_2, %c0_3, %c0_4] : memref<1x32x128xf32, #tpu.memory_space<vmem>>, vector<1x32x128xf32>
    %3 = vector.shape_cast %2 : vector<1x32x128xf32> to vector<32x128xf32>
    %c0_5 = arith.constant 0 : index
    %c0_6 = arith.constant 0 : index
    %4 = vector.load %arg5[%c0_5, %c0_6] : memref<128x128xf32, #tpu.memory_space<vmem>>, vector<128x128xf32>
    %cst = arith.constant dense<0.000000e+00> : vector<16x128xf32>
    %5 = tpu.matmul %1, %4, %cst {dimension_numbers = #tpu.dot_dimension_numbers<[1], [0], [0], [1], [0, 0, 1, 1], [], []>} : vector<16x128xf32>, vector<128x128xf32>, vector<16x128xf32> -> vector<16x128xf32>
    %c0_7 = arith.constant 0 : index
    %c0_8 = arith.constant 0 : index
    %6 = vector.load %arg8[%c0_7, %c0_8] : memref<1x128xf32, #tpu.memory_space<vmem>>, vector<1x128xf32>
    %7 = vector.broadcast %6 : vector<1x128xf32> to vector<16x128xf32>
    %8 = arith.addf %5, %7 : vector<16x128xf32>
    %c0_9 = arith.constant 0 : index
    %c0_10 = arith.constant 0 : index
    %9 = vector.load %arg6[%c0_9, %c0_10] : memref<128x128xf32, #tpu.memory_space<vmem>>, vector<128x128xf32>
    %cst_11 = arith.constant dense<0.000000e+00> : vector<32x128xf32>
    %10 = tpu.matmul %3, %9, %cst_11 {dimension_numbers = #tpu.dot_dimension_numbers<[1], [0], [0], [1], [0, 0, 1, 1], [], []>} : vector<32x128xf32>, vector<128x128xf32>, vector<32x128xf32> -> vector<32x128xf32>
    %c0_12 = arith.constant 0 : index
    %c0_13 = arith.constant 0 : index
    %11 = vector.load %arg9[%c0_12, %c0_13] : memref<1x128xf32, #tpu.memory_space<vmem>>, vector<1x128xf32>
    %12 = vector.broadcast %11 : vector<1x128xf32> to vector<32x128xf32>
    %13 = arith.addf %10, %12 : vector<32x128xf32>
    %c0_14 = arith.constant 0 : index
    %c0_15 = arith.constant 0 : index
    %14 = vector.load %arg7[%c0_14, %c0_15] : memref<128x128xf32, #tpu.memory_space<vmem>>, vector<128x128xf32>
    %cst_16 = arith.constant dense<0.000000e+00> : vector<32x128xf32>
    %15 = tpu.matmul %3, %14, %cst_16 {dimension_numbers = #tpu.dot_dimension_numbers<[1], [0], [0], [1], [0, 0, 1, 1], [], []>} : vector<32x128xf32>, vector<128x128xf32>, vector<32x128xf32> -> vector<32x128xf32>
    %c0_17 = arith.constant 0 : index
    %c0_18 = arith.constant 0 : index
    %16 = vector.load %arg10[%c0_17, %c0_18] : memref<1x128xf32, #tpu.memory_space<vmem>>, vector<1x128xf32>
    %17 = vector.broadcast %16 : vector<1x128xf32> to vector<32x128xf32>
    %18 = arith.addf %15, %17 : vector<32x128xf32>
    %19 = vector.shape_cast %8 : vector<16x128xf32> to vector<16x4x32xf32>
    %20 = vector.shape_cast %13 : vector<32x128xf32> to vector<32x4x32xf32>
    %21 = vector.shape_cast %18 : vector<32x128xf32> to vector<32x4x32xf32>
    "tpu.trace_start"() <{level = 10 : i32, message = "thd,shd->hts"}> : () -> ()
    %cst_19 = arith.constant dense<0.000000e+00> : vector<4x16x32xf32>
    %22 = tpu.matmul %19, %20, %cst_19 {dimension_numbers = #tpu.dot_dimension_numbers<[2], [2], [0], [0], [0, 1, 0, 0, 1, 0], [1], [1]>} : vector<16x4x32xf32>, vector<32x4x32xf32>, vector<4x16x32xf32> -> vector<4x16x32xf32>
    "tpu.trace_stop"() : () -> ()
    %cst_20 = arith.constant dense<0xFF800000> : vector<4x16xf32>
    %23 = vector.multi_reduction <maximumf>, %22, %cst_20 [2] : vector<4x16x32xf32> to vector<4x16xf32>
    %24 = vector.shape_cast %23 : vector<4x16xf32> to vector<4x16x1xf32>
    %25 = vector.broadcast %24 : vector<4x16x1xf32> to vector<4x16x32xf32>
    %26 = arith.subf %22, %25 : vector<4x16x32xf32>
    %27 = math.exp %26 : vector<4x16x32xf32>
    %cst_21 = arith.constant dense<0.000000e+00> : vector<4x16xf32>
    %28 = vector.multi_reduction <add>, %27, %cst_21 [2] : vector<4x16x32xf32> to vector<4x16xf32>
    %29 = vector.shape_cast %28 : vector<4x16xf32> to vector<4x16x1xf32>
    %30 = tpu.reciprocal %29 {approx = true} : vector<4x16x1xf32> -> vector<4x16x1xf32>
    %31 = vector.broadcast %30 : vector<4x16x1xf32> to vector<4x16x32xf32>
    %32 = arith.mulf %27, %31 : vector<4x16x32xf32>
    "tpu.trace_start"() <{level = 10 : i32, message = "hts,shd->thd"}> : () -> ()
    %cst_22 = arith.constant dense<0.000000e+00> : vector<4x32x16xf32>
    %33 = tpu.matmul %21, %32, %cst_22 {dimension_numbers = #tpu.dot_dimension_numbers<[0], [2], [2], [1], [0, 1, 0, 2, 1, 1], [1], [0]>} : vector<32x4x32xf32>, vector<4x16x32xf32>, vector<4x32x16xf32> -> vector<4x32x16xf32>
    %34 = tpu.transpose %33, [2, 0, 1] : vector<4x32x16xf32> -> vector<16x4x32xf32>
    "tpu.trace_stop"() : () -> ()
    %35 = vector.shape_cast %34 : vector<16x4x32xf32> to vector<16x128xf32>
    %c0_23 = arith.constant 0 : index
    %c0_24 = arith.constant 0 : index
    %36 = vector.load %arg11[%c0_23, %c0_24] : memref<128x128xf32, #tpu.memory_space<vmem>>, vector<128x128xf32>
    %cst_25 = arith.constant dense<0.000000e+00> : vector<16x128xf32>
    %37 = tpu.matmul %35, %36, %cst_25 {dimension_numbers = #tpu.dot_dimension_numbers<[1], [0], [0], [1], [0, 0, 1, 1], [], []>} : vector<16x128xf32>, vector<128x128xf32>, vector<16x128xf32> -> vector<16x128xf32>
    %c0_26 = arith.constant 0 : index
    %c0_27 = arith.constant 0 : index
    %38 = vector.load %arg12[%c0_26, %c0_27] : memref<1x128xf32, #tpu.memory_space<vmem>>, vector<1x128xf32>
    %39 = vector.broadcast %38 : vector<1x128xf32> to vector<16x128xf32>
    %40 = arith.addf %37, %39 : vector<16x128xf32>
    %cst_28 = arith.constant dense<0.000000e+00> : vector<16x32xf32>
    %41 = vector.multi_reduction <add>, %32, %cst_28 [0] : vector<4x16x32xf32> to vector<16x32xf32>
    %cst_29 = arith.constant 4.000000e+00 : f32
    %42 = vector.broadcast %cst_29 : f32 to vector<16x32xf32>
    %43 = arith.divf %41, %42 : vector<16x32xf32>
    %cst_30 = arith.constant 0.000000e+00 : f32
    %44 = vector.broadcast %cst_30 : f32 to vector<16x96xf32>
    %45 = tpu.concatenate %43, %44 in 1 : vector<16x32xf32>, vector<16x96xf32> -> vector<16x128xf32>
    %c0_31 = arith.constant 0 : index
    %c0_32 = arith.constant 0 : index
    %c0_33 = arith.constant 0 : index
    %46 = vector.load %arg22[%c0_31, %c0_32, %c0_33] : memref<1x16x128xf32, #tpu.memory_space<vmem>>, vector<1x16x128xf32>
    %47 = vector.shape_cast %46 : vector<1x16x128xf32> to vector<16x128xf32>
    %48 = vector.shape_cast %45 : vector<16x128xf32> to vector<1x16x128xf32>
    tpu.vector_store %arg22[%c0_31, %c0_32, %c0_33], %48 {strides = array<i32>} : memref<1x16x128xf32, #tpu.memory_space<vmem>>, vector<1x16x128xf32>,
    %c0_34 = arith.constant 0 : index
    %c0_35 = arith.constant 0 : index
    %c0_36 = arith.constant 0 : index
    %49 = vector.load %arg3[%c0_34, %c0_35, %c0_36] : memref<1x16x1xf32, #tpu.memory_space<vmem>>, vector<1x16x1xf32>
    %50 = vector.shape_cast %49 : vector<1x16x1xf32> to vector<16x1xf32>
    %c0_37 = arith.constant 0 : index
    %c0_38 = arith.constant 0 : index
    %c0_39 = arith.constant 0 : index
    %51 = vector.load %arg4[%c0_37, %c0_38, %c0_39] : memref<1x16x1xf32, #tpu.memory_space<vmem>>, vector<1x16x1xf32>
    %52 = vector.shape_cast %51 : vector<1x16x1xf32> to vector<16x1xf32>
    %cst_40 = arith.constant 0.000000e+00 : f32
    %53 = vector.broadcast %cst_40 : f32 to vector<16x1xf32>
    %54 = arith.cmpf one, %52, %53 : vector<16x1xf32>
    %55 = vector.broadcast %50 : vector<16x1xf32> to vector<16x128xf32>
    %56 = arith.mulf %40, %55 : vector<16x128xf32>
    %57 = vector.shape_cast %54 : vector<16x1xi1> to vector<16x1xi1>
    %58 = vector.broadcast %57 : vector<16x1xi1> to vector<16x128xi1>
    %59 = arith.select %58, %1, %56 : vector<16x128xi1>, vector<16x128xf32>
    %60 = arith.addf %1, %59 : vector<16x128xf32>
    %c0_41 = arith.constant 0 : index
    %c0_42 = arith.constant 0 : index
    %61 = vector.load %arg13[%c0_41, %c0_42] : memref<1x128xf32, #tpu.memory_space<vmem>>, vector<1x128xf32>
    %c0_43 = arith.constant 0 : index
    %c0_44 = arith.constant 0 : index
    %62 = vector.load %arg14[%c0_43, %c0_44] : memref<1x128xf32, #tpu.memory_space<vmem>>, vector<1x128xf32>
    %cst_45 = arith.constant dense<0.000000e+00> : vector<16xf32>
    %63 = vector.multi_reduction <add>, %60, %cst_45 [1] : vector<16x128xf32> to vector<16xf32>
    %64 = vector.shape_cast %63 : vector<16xf32> to vector<16x1xf32>
    %cst_46 = arith.constant 1.280000e+02 : f32
    %65 = vector.broadcast %cst_46 : f32 to vector<16x1xf32>
    %66 = arith.divf %64, %65 : vector<16x1xf32>
    %67 = vector.broadcast %66 : vector<16x1xf32> to vector<16x128xf32>
    %68 = arith.subf %60, %67 : vector<16x128xf32>
    %69 = arith.mulf %68, %68 : vector<16x128xf32>
    %cst_47 = arith.constant dense<0.000000e+00> : vector<16xf32>
    %70 = vector.multi_reduction <add>, %69, %cst_47 [1] : vector<16x128xf32> to vector<16xf32>
    %71 = vector.shape_cast %70 : vector<16xf32> to vector<16x1xf32>
    %cst_48 = arith.constant 1.280000e+02 : f32
    %72 = vector.broadcast %cst_48 : f32 to vector<16x1xf32>
    %73 = arith.divf %71, %72 : vector<16x1xf32>
    %cst_49 = arith.constant 9.99999974E-6 : f32
    %74 = vector.broadcast %cst_49 : f32 to vector<16x1xf32>
    %75 = arith.addf %73, %74 : vector<16x1xf32>
    %76 = math.rsqrt %75 : vector<16x1xf32>
    %77 = vector.broadcast %76 : vector<16x1xf32> to vector<16x128xf32>
    %78 = arith.mulf %68, %77 : vector<16x128xf32>
    %79 = vector.broadcast %61 : vector<1x128xf32> to vector<16x128xf32>
    %80 = arith.mulf %78, %79 : vector<16x128xf32>
    %81 = vector.broadcast %62 : vector<1x128xf32> to vector<16x128xf32>
    %82 = arith.addf %80, %81 : vector<16x128xf32>
    %83 = vector.broadcast %50 : vector<16x1xf32> to vector<16x128xf32>
    %84 = arith.mulf %82, %83 : vector<16x128xf32>
    %85 = vector.shape_cast %54 : vector<16x1xi1> to vector<16x1xi1>
    %86 = vector.broadcast %85 : vector<16x1xi1> to vector<16x128xi1>
    %87 = arith.select %86, %1, %84 : vector<16x128xi1>, vector<16x128xf32>
    %c0_50 = arith.constant 0 : index
    %c0_51 = arith.constant 0 : index
    %88 = vector.load %arg15[%c0_50, %c0_51] : memref<128x256xf32, #tpu.memory_space<vmem>>, vector<128x256xf32>
    %cst_52 = arith.constant dense<0.000000e+00> : vector<16x256xf32>
    %89 = tpu.matmul %87, %88, %cst_52 {dimension_numbers = #tpu.dot_dimension_numbers<[1], [0], [0], [1], [0, 0, 1, 1], [], []>} : vector<16x128xf32>, vector<128x256xf32>, vector<16x256xf32> -> vector<16x256xf32>
    %c0_53 = arith.constant 0 : index
    %c0_54 = arith.constant 0 : index
    %90 = vector.load %arg16[%c0_53, %c0_54] : memref<1x256xf32, #tpu.memory_space<vmem>>, vector<1x256xf32>
    %91 = vector.broadcast %90 : vector<1x256xf32> to vector<16x256xf32>
    %92 = arith.addf %89, %91 : vector<16x256xf32>
    %cst_55 = arith.constant 0.000000e+00 : f32
    %93 = vector.broadcast %cst_55 : f32 to vector<16x256xf32>
    %94 = arith.maximumf %92, %93 : vector<16x256xf32>
    %c0_56 = arith.constant 0 : index
    %c0_57 = arith.constant 0 : index
    %95 = vector.load %arg17[%c0_56, %c0_57] : memref<256x128xf32, #tpu.memory_space<vmem>>, vector<256x128xf32>
    %cst_58 = arith.constant dense<0.000000e+00> : vector<16x128xf32>
    %96 = tpu.matmul %94, %95, %cst_58 {dimension_numbers = #tpu.dot_dimension_numbers<[1], [0], [0], [1], [0, 0, 1, 1], [], []>} : vector<16x256xf32>, vector<256x128xf32>, vector<16x128xf32> -> vector<16x128xf32>
    %c0_59 = arith.constant 0 : index
    %c0_60 = arith.constant 0 : index
    %97 = vector.load %arg18[%c0_59, %c0_60] : memref<1x128xf32, #tpu.memory_space<vmem>>, vector<1x128xf32>
    %98 = vector.broadcast %97 : vector<1x128xf32> to vector<16x128xf32>
    %99 = arith.addf %96, %98 : vector<16x128xf32>
    %100 = arith.addf %87, %99 : vector<16x128xf32>
    %c0_61 = arith.constant 0 : index
    %c0_62 = arith.constant 0 : index
    %101 = vector.load %arg19[%c0_61, %c0_62] : memref<1x128xf32, #tpu.memory_space<vmem>>, vector<1x128xf32>
    %c0_63 = arith.constant 0 : index
    %c0_64 = arith.constant 0 : index
    %102 = vector.load %arg20[%c0_63, %c0_64] : memref<1x128xf32, #tpu.memory_space<vmem>>, vector<1x128xf32>
    %cst_65 = arith.constant dense<0.000000e+00> : vector<16xf32>
    %103 = vector.multi_reduction <add>, %100, %cst_65 [1] : vector<16x128xf32> to vector<16xf32>
    %104 = vector.shape_cast %103 : vector<16xf32> to vector<16x1xf32>
    %cst_66 = arith.constant 1.280000e+02 : f32
    %105 = vector.broadcast %cst_66 : f32 to vector<16x1xf32>
    %106 = arith.divf %104, %105 : vector<16x1xf32>
    %107 = vector.broadcast %106 : vector<16x1xf32> to vector<16x128xf32>
    %108 = arith.subf %100, %107 : vector<16x128xf32>
    %109 = arith.mulf %108, %108 : vector<16x128xf32>
    %cst_67 = arith.constant dense<0.000000e+00> : vector<16xf32>
    %110 = vector.multi_reduction <add>, %109, %cst_67 [1] : vector<16x128xf32> to vector<16xf32>
    %111 = vector.shape_cast %110 : vector<16xf32> to vector<16x1xf32>
    %cst_68 = arith.constant 1.280000e+02 : f32
    %112 = vector.broadcast %cst_68 : f32 to vector<16x1xf32>
    %113 = arith.divf %111, %112 : vector<16x1xf32>
    %cst_69 = arith.constant 9.99999974E-6 : f32
    %114 = vector.broadcast %cst_69 : f32 to vector<16x1xf32>
    %115 = arith.addf %113, %114 : vector<16x1xf32>
    %116 = math.rsqrt %115 : vector<16x1xf32>
    %117 = vector.broadcast %116 : vector<16x1xf32> to vector<16x128xf32>
    %118 = arith.mulf %108, %117 : vector<16x128xf32>
    %119 = vector.broadcast %101 : vector<1x128xf32> to vector<16x128xf32>
    %120 = arith.mulf %118, %119 : vector<16x128xf32>
    %121 = vector.broadcast %102 : vector<1x128xf32> to vector<16x128xf32>
    %122 = arith.addf %120, %121 : vector<16x128xf32>
    %123 = vector.broadcast %50 : vector<16x1xf32> to vector<16x128xf32>
    %124 = arith.mulf %122, %123 : vector<16x128xf32>
    %125 = vector.shape_cast %54 : vector<16x1xi1> to vector<16x1xi1>
    %126 = vector.broadcast %125 : vector<16x1xi1> to vector<16x128xi1>
    %127 = arith.select %126, %87, %124 : vector<16x128xi1>, vector<16x128xf32>
    %c0_70 = arith.constant 0 : index
    %c0_71 = arith.constant 0 : index
    %c0_72 = arith.constant 0 : index
    %128 = vector.load %arg21[%c0_70, %c0_71, %c0_72] : memref<1x16x128xf32, #tpu.memory_space<vmem>>, vector<1x16x128xf32>
    %129 = vector.shape_cast %128 : vector<1x16x128xf32> to vector<16x128xf32>
    %130 = vector.shape_cast %127 : vector<16x128xf32> to vector<1x16x128xf32>
    tpu.vector_store %arg21[%c0_70, %c0_71, %c0_72], %130 {strides = array<i32>} : memref<1x16x128xf32, #tpu.memory_space<vmem>>, vector<1x16x128xf32>,
    return
  }
  func.func @transform_0(%arg0: i32) -> (i32, i32, i32) {
    %c0_i32 = arith.constant 0 : i32
    %c0_i32_0 = arith.constant 0 : i32
    %c0_i32_1 = arith.constant 0 : i32
    return %arg0, %c0_i32, %c0_i32_0 : i32, i32, i32
  }
  func.func @transform_1(%arg0: i32) -> (i32, i32, i32) {
    %c0_i32 = arith.constant 0 : i32
    %c0_i32_0 = arith.constant 0 : i32
    %c0_i32_1 = arith.constant 0 : i32
    return %arg0, %c0_i32, %c0_i32_0 : i32, i32, i32
  }
  func.func @transform_2(%arg0: i32) -> (i32, i32, i32) {
    %c0_i32 = arith.constant 0 : i32
    %c0_i32_0 = arith.constant 0 : i32
    %c0_i32_1 = arith.constant 0 : i32
    return %arg0, %c0_i32, %c0_i32_0 : i32, i32, i32
  }
  func.func @transform_3(%arg0: i32) -> (i32, i32, i32) {
    %c0_i32 = arith.constant 0 : i32
    %c0_i32_0 = arith.constant 0 : i32
    %c0_i32_1 = arith.constant 0 : i32
    return %arg0, %c0_i32, %c0_i32_0 : i32, i32, i32
  }
  func.func @transform_4(%arg0: i32) -> (i32, i32) {
    %c0_i32 = arith.constant 0 : i32
    %c0_i32_0 = arith.constant 0 : i32
    %c0_i32_1 = arith.constant 0 : i32
    return %c0_i32, %c0_i32_0 : i32, i32
  }
  func.func @transform_5(%arg0: i32) -> (i32, i32) {
    %c0_i32 = arith.constant 0 : i32
    %c0_i32_0 = arith.constant 0 : i32
    %c0_i32_1 = arith.constant 0 : i32
    return %c0_i32, %c0_i32_0 : i32, i32
  }
  func.func @transform_6(%arg0: i32) -> (i32, i32) {
    %c0_i32 = arith.constant 0 : i32
    %c0_i32_0 = arith.constant 0 : i32
    %c0_i32_1 = arith.constant 0 : i32
    return %c0_i32, %c0_i32_0 : i32, i32
  }
  func.func @transform_7(%arg0: i32) -> (i32, i32) {
    %c0_i32 = arith.constant 0 : i32
    %c0_i32_0 = arith.constant 0 : i32
    %c0_i32_1 = arith.constant 0 : i32
    return %c0_i32, %c0_i32_0 : i32, i32
  }
  func.func @transform_8(%arg0: i32) -> (i32, i32) {
    %c0_i32 = arith.constant 0 : i32
    %c0_i32_0 = arith.constant 0 : i32
    %c0_i32_1 = arith.constant 0 : i32
    return %c0_i32, %c0_i32_0 : i32, i32
  }
  func.func @transform_9(%arg0: i32) -> (i32, i32) {
    %c0_i32 = arith.constant 0 : i32
    %c0_i32_0 = arith.constant 0 : i32
    %c0_i32_1 = arith.constant 0 : i32
    return %c0_i32, %c0_i32_0 : i32, i32
  }
  func.func @transform_10(%arg0: i32) -> (i32, i32) {
    %c0_i32 = arith.constant 0 : i32
    %c0_i32_0 = arith.constant 0 : i32
    %c0_i32_1 = arith.constant 0 : i32
    return %c0_i32, %c0_i32_0 : i32, i32
  }
  func.func @transform_11(%arg0: i32) -> (i32, i32) {
    %c0_i32 = arith.constant 0 : i32
    %c0_i32_0 = arith.constant 0 : i32
    %c0_i32_1 = arith.constant 0 : i32
    return %c0_i32, %c0_i32_0 : i32, i32
  }
  func.func @transform_12(%arg0: i32) -> (i32, i32) {
    %c0_i32 = arith.constant 0 : i32
    %c0_i32_0 = arith.constant 0 : i32
    %c0_i32_1 = arith.constant 0 : i32
    return %c0_i32, %c0_i32_0 : i32, i32
  }
  func.func @transform_13(%arg0: i32) -> (i32, i32) {
    %c0_i32 = arith.constant 0 : i32
    %c0_i32_0 = arith.constant 0 : i32
    %c0_i32_1 = arith.constant 0 : i32
    return %c0_i32, %c0_i32_0 : i32, i32
  }
  func.func @transform_14(%arg0: i32) -> (i32, i32) {
    %c0_i32 = arith.constant 0 : i32
    %c0_i32_0 = arith.constant 0 : i32
    %c0_i32_1 = arith.constant 0 : i32
    return %c0_i32, %c0_i32_0 : i32, i32
  }
  func.func @transform_15(%arg0: i32) -> (i32, i32) {
    %c0_i32 = arith.constant 0 : i32
    %c0_i32_0 = arith.constant 0 : i32
    %c0_i32_1 = arith.constant 0 : i32
    return %c0_i32, %c0_i32_0 : i32, i32
  }
  func.func @transform_16(%arg0: i32) -> (i32, i32) {
    %c0_i32 = arith.constant 0 : i32
    %c0_i32_0 = arith.constant 0 : i32
    %c0_i32_1 = arith.constant 0 : i32
    return %c0_i32, %c0_i32_0 : i32, i32
  }
  func.func @transform_17(%arg0: i32) -> (i32, i32) {
    %c0_i32 = arith.constant 0 : i32
    %c0_i32_0 = arith.constant 0 : i32
    %c0_i32_1 = arith.constant 0 : i32
    return %c0_i32, %c0_i32_0 : i32, i32
  }
  func.func @transform_18(%arg0: i32) -> (i32, i32) {
    %c0_i32 = arith.constant 0 : i32
    %c0_i32_0 = arith.constant 0 : i32
    %c0_i32_1 = arith.constant 0 : i32
    return %c0_i32, %c0_i32_0 : i32, i32
  }
  func.func @transform_19(%arg0: i32) -> (i32, i32) {
    %c0_i32 = arith.constant 0 : i32
    %c0_i32_0 = arith.constant 0 : i32
    %c0_i32_1 = arith.constant 0 : i32
    return %c0_i32, %c0_i32_0 : i32, i32
  }
  func.func @transform_20(%arg0: i32) -> (i32, i32, i32) {
    %c0_i32 = arith.constant 0 : i32
    %c0_i32_0 = arith.constant 0 : i32
    %c0_i32_1 = arith.constant 0 : i32
    return %arg0, %c0_i32, %c0_i32_0 : i32, i32, i32
  }
  func.func @transform_21(%arg0: i32) -> (i32, i32, i32) {
    %c0_i32 = arith.constant 0 : i32
    %c0_i32_0 = arith.constant 0 : i32
    %c0_i32_1 = arith.constant 0 : i32
    return %arg0, %c0_i32, %c0_i32_0 : i32, i32, i32
  }
}

</mosaic_0001>

<llo_original>
// kernel: tpu_custom_call.1
$region0: #{tpu_custom_call.1}
  #allocation0 [shape = 'u32[]', space=smem, size = 0x4, offset = 0x4, fixed_abs, tag = 'smem constant byte address 0x4 - core index']
  #allocation1 [shape = 'u32[72,128]{1,0:T(1,128)}', space=vmem, size = 0x9000, scoped, tag = 'internal scratch']
  %s0 = inlined_call_operand.hbm [shape: f32[2,16,128], index: 0, kind: input, shape index: {}]
  %s1 = inlined_call_operand.vmem [shape: f32[2,32,128], index: 1, kind: input, shape index: {}]
  %s2 = inlined_call_operand.vmem [shape: f32[2,16,1], index: 2, kind: input, shape index: {}]
  %s3 = inlined_call_operand.vmem [shape: f32[2,16,1], index: 3, kind: input, shape index: {}]
  %s4 = inlined_call_operand.hbm [shape: f32[128,128], index: 4, kind: input, shape index: {}]
  %s5 = inlined_call_operand.hbm [shape: f32[128,128], index: 5, kind: input, shape index: {}]
  %s6 = inlined_call_operand.hbm [shape: f32[128,128], index: 6, kind: input, shape index: {}]
  %s7 = inlined_call_operand.vmem [shape: f32[1,128], index: 7, kind: input, shape index: {}]
  %s8 = inlined_call_operand.vmem [shape: f32[1,128], index: 8, kind: input, shape index: {}]
  %s9 = inlined_call_operand.vmem [shape: f32[1,128], index: 9, kind: input, shape index: {}]
  %s10 = inlined_call_operand.hbm [shape: f32[128,128], index: 10, kind: input, shape index: {}]
  %s11 = inlined_call_operand.vmem [shape: f32[1,128], index: 11, kind: input, shape index: {}]
  %s12 = inlined_call_operand.vmem [shape: f32[1,128], index: 12, kind: input, shape index: {}]
  %s13 = inlined_call_operand.vmem [shape: f32[1,128], index: 13, kind: input, shape index: {}]
  %s14 = inlined_call_operand.hbm [shape: f32[128,256], index: 14, kind: input, shape index: {}]
  %s15 = inlined_call_operand.vmem [shape: f32[1,256], index: 15, kind: input, shape index: {}]
  %s16 = inlined_call_operand.hbm [shape: f32[256,128], index: 16, kind: input, shape index: {}]
  %s17 = inlined_call_operand.vmem [shape: f32[1,128], index: 17, kind: input, shape index: {}]
  %s18 = inlined_call_operand.vmem [shape: f32[1,128], index: 18, kind: input, shape index: {}]
  %s19 = inlined_call_operand.vmem [shape: f32[1,128], index: 19, kind: input, shape index: {}]
  %s20 = inlined_call_operand.hbm [shape: f32[2,16,128], index: 20, kind: output, shape index: {0}]
  %s21 = inlined_call_operand.hbm [shape: f32[2,16,128], index: 21, kind: output, shape index: {1}]
  %22 = xla_tuple %s20, %s21
  %s23 = sld [smem:[#allocation0]]
  $region149: #{tpu_custom_call.1} parent=0
    _
  %s25 = ssub.s32 1, %s23
  %s26 = scalar_select 0, %s25, %s23
  $region1: #{tpu_custom_call.1} parent=0
    #allocation2 [shape = 'u8[16384]{0}', space=vmem, size = 0x4000, scoped, tag = 'input window, operand 0']
    #allocation3 [shape = 's32[2]{0}', space=sflag, size = 0x8, scoped, tag = 'scoped memory for tpu_custom_call.1']
    #allocation4 [shape = 's32[2]{0}', space=sflag, size = 0x8, scoped, tag = 'scoped memory for tpu_custom_call.1']
    #allocation5 [shape = 'u8[65536]{0}', space=vmem, size = 0x10000, scoped, tag = 'input window, operand 4, single buffered']
    #allocation6 [shape = 's32[1]{0}', space=sflag, size = 0x4, scoped, tag = 'scoped memory for tpu_custom_call.1']
    #allocation7 [shape = 'u8[65536]{0}', space=vmem, size = 0x10000, scoped, tag = 'input window, operand 5, single buffered']
    #allocation8 [shape = 'u8[65536]{0}', space=vmem, size = 0x10000, scoped, tag = 'input window, operand 6, single buffered']
    #allocation9 [shape = 's32[1]{0}', space=sflag, size = 0x4, scoped, tag = 'scoped memory for tpu_custom_call.1']
    #allocation10 [shape = 'u8[65536]{0}', space=vmem, size = 0x10000, scoped, tag = 'input window, operand 10, single buffered']
    #allocation11 [shape = 'u8[131072]{0}', space=vmem, size = 0x20000, scoped, tag = 'input window, operand 14, single buffered']
    #allocation12 [shape = 's32[1]{0}', space=sflag, size = 0x4, scoped, tag = 'scoped memory for tpu_custom_call.1']
    #allocation13 [shape = 'u8[131072]{0}', space=vmem, size = 0x20000, scoped, tag = 'input window, operand 16, single buffered']
    #allocation14 [shape = 'u8[16384]{0}', space=vmem, size = 0x4000, scoped, tag = 'output window, operand 0']
    #allocation15 [shape = 'u8[16384]{0}', space=vmem, size = 0x4000, scoped, tag = 'output window, operand 1']
    #allocation16 [shape = 's32[2]{0}', space=sflag, size = 0x8, scoped, tag = 'scoped memory for tpu_custom_call.1']
    %27 = vsyncpa [#allocation3], 0
    %s28 = scalar_lea.sflag [#allocation3], 1
    %29 = vsyncpa %s28, 0
    %30 = vsyncpa [#allocation6], 0
    %31 = vsyncpa [#allocation9], 0
    %32 = vsyncpa [#allocation12], 0
    %33 = vsyncpa [#allocation4], 0
    %s34 = scalar_lea.sflag [#allocation4], 1
    %35 = vsyncpa %s34, 0
    %36 = vsyncpa [#allocation16], 0
    %s37 = scalar_lea.sflag [#allocation16], 1
    %38 = vsyncpa %s37, 0
    loop: start=0, step=1, limit=4
    $region2: #{tpu_custom_call.1} parent=1 // loop_pre_header
      _
    $region3: #{tpu_custom_call.1} parent=1 // loop_header
      %s40 = sphi 0, %s44
      %p41 = scmp.ge.s32.totalorder %s40, 4
      %s50 = sphi 0, %s52
      %s53 = sphi 0, %s50
      %s54 = sphi 0, %s53
      %s70 = sphi 0, %s54
      %s76 = sphi 0, %s78
      %s79 = sphi 0, %s76
      %s80 = sphi 0, %s79
      %s96 = sphi 0, %s80
      %s102 = sphi 0, %s104
      %s105 = sphi 0, %s102
      %s106 = sphi 0, %s105
      %s122 = sphi 0, %s106
      %s128 = sphi 0, %s130
      %s131 = sphi 0, %s128
      %s132 = sphi 0, %s131
      %s148 = sphi 0, %s132
      %s152 = sphi 0, %s152
      %s154 = sphi 0, %s152
      %s155 = sphi 0, %s154
      %s169 = sphi 0, %s155
      %s173 = sphi 0, %s173
      %s175 = sphi 0, %s173
      %s176 = sphi 0, %s175
      %s190 = sphi 0, %s176
      %s194 = sphi 0, %s194
      %s196 = sphi 0, %s194
      %s197 = sphi 0, %s196
      %s211 = sphi 0, %s197
      %s215 = sphi 0, %s215
      %s217 = sphi 0, %s215
      %s218 = sphi 0, %s217
      %s232 = sphi 0, %s218
      %s236 = sphi 0, %s236
      %s238 = sphi 0, %s236
      %s239 = sphi 0, %s238
      %s253 = sphi 0, %s239
      %s257 = sphi 0, %s257
      %s259 = sphi 0, %s257
      %s260 = sphi 0, %s259
      %s274 = sphi 0, %s260
      %s278 = sphi 0, %s278
      %s280 = sphi 0, %s278
      %s281 = sphi 0, %s280
      %s295 = sphi 0, %s281
      %s299 = sphi 0, %s299
      %s301 = sphi 0, %s299
      %s302 = sphi 0, %s301
      %s316 = sphi 0, %s302
      %s320 = sphi 0, %s320
      %s322 = sphi 0, %s320
      %s323 = sphi 0, %s322
      %s337 = sphi 0, %s323
      %s341 = sphi 0, %s341
      %s343 = sphi 0, %s341
      %s344 = sphi 0, %s343
      %s358 = sphi 0, %s344
      %s362 = sphi 0, %s362
      %s364 = sphi 0, %s362
      %s365 = sphi 0, %s364
      %s379 = sphi 0, %s365
      %s383 = sphi 0, %s383
      %s385 = sphi 0, %s383
      %s386 = sphi 0, %s385
      %s400 = sphi 0, %s386
      %s404 = sphi 0, %s404
      %s406 = sphi 0, %s404
      %s407 = sphi 0, %s406
      %s421 = sphi 0, %s407
      %s425 = sphi 0, %s425
      %s427 = sphi 0, %s425
      %s428 = sphi 0, %s427
      %s442 = sphi 0, %s428
      %s446 = sphi 0, %s446
      %s448 = sphi 0, %s446
      %s449 = sphi 0, %s448
      %s463 = sphi 0, %s449
      %s467 = sphi 0, %s467
      %s469 = sphi 0, %s467
      %s470 = sphi 0, %s469
      %s484 = sphi 0, %s470
      %s490 = sphi 0, %s492
      %s493 = sphi 0, %s490
      %s494 = sphi 0, %s493
      %s510 = sphi 0, %s494
      %s516 = sphi 0, %s518
      %s519 = sphi 0, %s516
      %s520 = sphi 0, %s519
      %s536 = sphi 0, %s520
    $region4: #{tpu_custom_call.1} parent=1 // loop_header_branch
      %43 = sbr.rel (%p41) target = $region8
    $region5: #{tpu_custom_call.1} parent=1 // loop_body
      %s45 = ssub.s32 %s40, 1
      %s46 = ssub.s32 %s40, 2
      %s47 = sadd.s32 %s40, 1
      %s48 = ssub.s32 %s40, %s47
      %p49 = scmp.eq.s32.totalorder %s48, 0
      %s51 = sadd.s32 %s50, 1
      %s52 = scalar_select %p49, %s50, %s51
      %p55 = pneg %p49
      %p56 = scmp.eq.s32.totalorder %s40, 1
      %p57 = por %p55, %p56
      %p58 = scmp.ne.s32.totalorder %s50, %s53
      %p59 = scmp.eq.s32.totalorder %s40, 0
      %p60 = por %p58, %p59
      %p61 = scmp.ne.s32.totalorder %s50, %s53
      %p62 = scmp.eq.s32.totalorder %s45, 1
      %p63 = por %p61, %p62
      %p64 = scmp.ne.s32.totalorder %s53, %s54
      %p65 = scmp.eq.s32.totalorder %s45, 0
      %p66 = por %p64, %p65
      %p67 = scmp.ne.s32.totalorder %s53, %s54
      %p68 = scmp.eq.s32.totalorder %s46, 1
      %p69 = por %p67, %p68
      %p71 = scmp.ne.s32.totalorder %s54, %s70
      %p72 = scmp.eq.s32.totalorder %s46, 0
      %p73 = por %p71, %p72
      %s74 = ssub.s32 %s40, %s47
      %p75 = scmp.eq.s32.totalorder %s74, 0
      %s77 = sadd.s32 %s76, 1
      %s78 = scalar_select %p75, %s76, %s77
      %p81 = pneg %p75
      %p82 = scmp.eq.s32.totalorder %s40, 1
      %p83 = por %p81, %p82
      %p84 = scmp.ne.s32.totalorder %s76, %s79
      %p85 = scmp.eq.s32.totalorder %s40, 0
      %p86 = por %p84, %p85
      %p87 = scmp.ne.s32.totalorder %s76, %s79
      %p88 = scmp.eq.s32.totalorder %s45, 1
      %p89 = por %p87, %p88
      %p90 = scmp.ne.s32.totalorder %s79, %s80
      %p91 = scmp.eq.s32.totalorder %s45, 0
      %p92 = por %p90, %p91
      %p93 = scmp.ne.s32.totalorder %s79, %s80
      %p94 = scmp.eq.s32.totalorder %s46, 1
      %p95 = por %p93, %p94
      %p97 = scmp.ne.s32.totalorder %s80, %s96
      %p98 = scmp.eq.s32.totalorder %s46, 0
      %p99 = por %p97, %p98
      %s100 = ssub.s32 %s40, %s47
      %p101 = scmp.eq.s32.totalorder %s100, 0
      %s103 = sadd.s32 %s102, 1
      %s104 = scalar_select %p101, %s102, %s103
      %p107 = pneg %p101
      %p108 = scmp.eq.s32.totalorder %s40, 1
      %p109 = por %p107, %p108
      %p110 = scmp.ne.s32.totalorder %s102, %s105
      %p111 = scmp.eq.s32.totalorder %s40, 0
      %p112 = por %p110, %p111
      %p113 = scmp.ne.s32.totalorder %s102, %s105
      %p114 = scmp.eq.s32.totalorder %s45, 1
      %p115 = por %p113, %p114
      %p116 = scmp.ne.s32.totalorder %s105, %s106
      %p117 = scmp.eq.s32.totalorder %s45, 0
      %p118 = por %p116, %p117
      %p119 = scmp.ne.s32.totalorder %s105, %s106
      %p120 = scmp.eq.s32.totalorder %s46, 1
      %p121 = por %p119, %p120
      %p123 = scmp.ne.s32.totalorder %s106, %s122
      %p124 = scmp.eq.s32.totalorder %s46, 0
      %p125 = por %p123, %p124
      %s126 = ssub.s32 %s40, %s47
      %p127 = scmp.eq.s32.totalorder %s126, 0
      %s129 = sadd.s32 %s128, 1
      %s130 = scalar_select %p127, %s128, %s129
      %p133 = pneg %p127
      %p134 = scmp.eq.s32.totalorder %s40, 1
      %p135 = por %p133, %p134
      %p136 = scmp.ne.s32.totalorder %s128, %s131
      %p137 = scmp.eq.s32.totalorder %s40, 0
      %p138 = por %p136, %p137
      %p139 = scmp.ne.s32.totalorder %s128, %s131
      %p140 = scmp.eq.s32.totalorder %s45, 1
      %p141 = por %p139, %p140
      %p142 = scmp.ne.s32.totalorder %s131, %s132
      %p143 = scmp.eq.s32.totalorder %s45, 0
      %p144 = por %p142, %p143
      %p145 = scmp.ne.s32.totalorder %s131, %s132
      %p146 = scmp.eq.s32.totalorder %s46, 1
      %p147 = por %p145, %p146
      %p149 = scmp.ne.s32.totalorder %s132, %s148
      %p150 = scmp.eq.s32.totalorder %s46, 0
      %p151 = por %p149, %p150
      %s153 = sadd.s32 %s152, 1
      %p156 = scmp.eq.s32.totalorder %s40, 1
      %p157 = scmp.ne.s32.totalorder %s152, %s154
      %p158 = scmp.eq.s32.totalorder %s40, 0
      %p159 = por %p157, %p158
      %p160 = scmp.ne.s32.totalorder %s152, %s154
      %p161 = scmp.eq.s32.totalorder %s45, 1
      %p162 = por %p160, %p161
      %p163 = scmp.ne.s32.totalorder %s154, %s155
      %p164 = scmp.eq.s32.totalorder %s45, 0
      %p165 = por %p163, %p164
      %p166 = scmp.ne.s32.totalorder %s154, %s155
      %p167 = scmp.eq.s32.totalorder %s46, 1
      %p168 = por %p166, %p167
      %p170 = scmp.ne.s32.totalorder %s155, %s169
      %p171 = scmp.eq.s32.totalorder %s46, 0
      %p172 = por %p170, %p171
      %s174 = sadd.s32 %s173, 1
      %p177 = scmp.eq.s32.totalorder %s40, 1
      %p178 = scmp.ne.s32.totalorder %s173, %s175
      %p179 = scmp.eq.s32.totalorder %s40, 0
      %p180 = por %p178, %p179
      %p181 = scmp.ne.s32.totalorder %s173, %s175
      %p182 = scmp.eq.s32.totalorder %s45, 1
      %p183 = por %p181, %p182
      %p184 = scmp.ne.s32.totalorder %s175, %s176
      %p185 = scmp.eq.s32.totalorder %s45, 0
      %p186 = por %p184, %p185
      %p187 = scmp.ne.s32.totalorder %s175, %s176
      %p188 = scmp.eq.s32.totalorder %s46, 1
      %p189 = por %p187, %p188
      %p191 = scmp.ne.s32.totalorder %s176, %s190
      %p192 = scmp.eq.s32.totalorder %s46, 0
      %p193 = por %p191, %p192
      %s195 = sadd.s32 %s194, 1
      %p198 = scmp.eq.s32.totalorder %s40, 1
      %p199 = scmp.ne.s32.totalorder %s194, %s196
      %p200 = scmp.eq.s32.totalorder %s40, 0
      %p201 = por %p199, %p200
      %p202 = scmp.ne.s32.totalorder %s194, %s196
      %p203 = scmp.eq.s32.totalorder %s45, 1
      %p204 = por %p202, %p203
      %p205 = scmp.ne.s32.totalorder %s196, %s197
      %p206 = scmp.eq.s32.totalorder %s45, 0
      %p207 = por %p205, %p206
      %p208 = scmp.ne.s32.totalorder %s196, %s197
      %p209 = scmp.eq.s32.totalorder %s46, 1
      %p210 = por %p208, %p209
      %p212 = scmp.ne.s32.totalorder %s197, %s211
      %p213 = scmp.eq.s32.totalorder %s46, 0
      %p214 = por %p212, %p213
      %s216 = sadd.s32 %s215, 1
      %p219 = scmp.eq.s32.totalorder %s40, 1
      %p220 = scmp.ne.s32.totalorder %s215, %s217
      %p221 = scmp.eq.s32.totalorder %s40, 0
      %p222 = por %p220, %p221
      %p223 = scmp.ne.s32.totalorder %s215, %s217
      %p224 = scmp.eq.s32.totalorder %s45, 1
      %p225 = por %p223, %p224
      %p226 = scmp.ne.s32.totalorder %s217, %s218
      %p227 = scmp.eq.s32.totalorder %s45, 0
      %p228 = por %p226, %p227
      %p229 = scmp.ne.s32.totalorder %s217, %s218
      %p230 = scmp.eq.s32.totalorder %s46, 1
      %p231 = por %p229, %p230
      %p233 = scmp.ne.s32.totalorder %s218, %s232
      %p234 = scmp.eq.s32.totalorder %s46, 0
      %p235 = por %p233, %p234
      %s237 = sadd.s32 %s236, 1
      %p240 = scmp.eq.s32.totalorder %s40, 1
      %p241 = scmp.ne.s32.totalorder %s236, %s238
      %p242 = scmp.eq.s32.totalorder %s40, 0
      %p243 = por %p241, %p242
      %p244 = scmp.ne.s32.totalorder %s236, %s238
      %p245 = scmp.eq.s32.totalorder %s45, 1
      %p246 = por %p244, %p245
      %p247 = scmp.ne.s32.totalorder %s238, %s239
      %p248 = scmp.eq.s32.totalorder %s45, 0
      %p249 = por %p247, %p248
      %p250 = scmp.ne.s32.totalorder %s238, %s239
      %p251 = scmp.eq.s32.totalorder %s46, 1
      %p252 = por %p250, %p251
      %p254 = scmp.ne.s32.totalorder %s239, %s253
      %p255 = scmp.eq.s32.totalorder %s46, 0
      %p256 = por %p254, %p255
      %s258 = sadd.s32 %s257, 1
      %p261 = scmp.eq.s32.totalorder %s40, 1
      %p262 = scmp.ne.s32.totalorder %s257, %s259
      %p263 = scmp.eq.s32.totalorder %s40, 0
      %p264 = por %p262, %p263
      %p265 = scmp.ne.s32.totalorder %s257, %s259
      %p266 = scmp.eq.s32.totalorder %s45, 1
      %p267 = por %p265, %p266
      %p268 = scmp.ne.s32.totalorder %s259, %s260
      %p269 = scmp.eq.s32.totalorder %s45, 0
      %p270 = por %p268, %p269
      %p271 = scmp.ne.s32.totalorder %s259, %s260
      %p272 = scmp.eq.s32.totalorder %s46, 1
      %p273 = por %p271, %p272
      %p275 = scmp.ne.s32.totalorder %s260, %s274
      %p276 = scmp.eq.s32.totalorder %s46, 0
      %p277 = por %p275, %p276
      %s279 = sadd.s32 %s278, 1
      %p282 = scmp.eq.s32.totalorder %s40, 1
      %p283 = scmp.ne.s32.totalorder %s278, %s280
      %p284 = scmp.eq.s32.totalorder %s40, 0
      %p285 = por %p283, %p284
      %p286 = scmp.ne.s32.totalorder %s278, %s280
      %p287 = scmp.eq.s32.totalorder %s45, 1
      %p288 = por %p286, %p287
      %p289 = scmp.ne.s32.totalorder %s280, %s281
      %p290 = scmp.eq.s32.totalorder %s45, 0
      %p291 = por %p289, %p290
      %p292 = scmp.ne.s32.totalorder %s280, %s281
      %p293 = scmp.eq.s32.totalorder %s46, 1
      %p294 = por %p292, %p293
      %p296 = scmp.ne.s32.totalorder %s281, %s295
      %p297 = scmp.eq.s32.totalorder %s46, 0
      %p298 = por %p296, %p297
      %s300 = sadd.s32 %s299, 1
      %p303 = scmp.eq.s32.totalorder %s40, 1
      %p304 = scmp.ne.s32.totalorder %s299, %s301
      %p305 = scmp.eq.s32.totalorder %s40, 0
      %p306 = por %p304, %p305
      %p307 = scmp.ne.s32.totalorder %s299, %s301
      %p308 = scmp.eq.s32.totalorder %s45, 1
      %p309 = por %p307, %p308
      %p310 = scmp.ne.s32.totalorder %s301, %s302
      %p311 = scmp.eq.s32.totalorder %s45, 0
      %p312 = por %p310, %p311
      %p313 = scmp.ne.s32.totalorder %s301, %s302
      %p314 = scmp.eq.s32.totalorder %s46, 1
      %p315 = por %p313, %p314
      %p317 = scmp.ne.s32.totalorder %s302, %s316
      %p318 = scmp.eq.s32.totalorder %s46, 0
      %p319 = por %p317, %p318
      %s321 = sadd.s32 %s320, 1
      %p324 = scmp.eq.s32.totalorder %s40, 1
      %p325 = scmp.ne.s32.totalorder %s320, %s322
      %p326 = scmp.eq.s32.totalorder %s40, 0
      %p327 = por %p325, %p326
      %p328 = scmp.ne.s32.totalorder %s320, %s322
      %p329 = scmp.eq.s32.totalorder %s45, 1
      %p330 = por %p328, %p329
      %p331 = scmp.ne.s32.totalorder %s322, %s323
      %p332 = scmp.eq.s32.totalorder %s45, 0
      %p333 = por %p331, %p332
      %p334 = scmp.ne.s32.totalorder %s322, %s323
      %p335 = scmp.eq.s32.totalorder %s46, 1
      %p336 = por %p334, %p335
      %p338 = scmp.ne.s32.totalorder %s323, %s337
      %p339 = scmp.eq.s32.totalorder %s46, 0
      %p340 = por %p338, %p339
      %s342 = sadd.s32 %s341, 1
      %p345 = scmp.eq.s32.totalorder %s40, 1
      %p346 = scmp.ne.s32.totalorder %s341, %s343
      %p347 = scmp.eq.s32.totalorder %s40, 0
      %p348 = por %p346, %p347
      %p349 = scmp.ne.s32.totalorder %s341, %s343
      %p350 = scmp.eq.s32.totalorder %s45, 1
      %p351 = por %p349, %p350
      %p352 = scmp.ne.s32.totalorder %s343, %s344
      %p353 = scmp.eq.s32.totalorder %s45, 0
      %p354 = por %p352, %p353
      %p355 = scmp.ne.s32.totalorder %s343, %s344
      %p356 = scmp.eq.s32.totalorder %s46, 1
      %p357 = por %p355, %p356
      %p359 = scmp.ne.s32.totalorder %s344, %s358
      %p360 = scmp.eq.s32.totalorder %s46, 0
      %p361 = por %p359, %p360
      %s363 = sadd.s32 %s362, 1
      %p366 = scmp.eq.s32.totalorder %s40, 1
      %p367 = scmp.ne.s32.totalorder %s362, %s364
      %p368 = scmp.eq.s32.totalorder %s40, 0
      %p369 = por %p367, %p368
      %p370 = scmp.ne.s32.totalorder %s362, %s364
      %p371 = scmp.eq.s32.totalorder %s45, 1
      %p372 = por %p370, %p371
      %p373 = scmp.ne.s32.totalorder %s364, %s365
      %p374 = scmp.eq.s32.totalorder %s45, 0
      %p375 = por %p373, %p374
      %p376 = scmp.ne.s32.totalorder %s364, %s365
      %p377 = scmp.eq.s32.totalorder %s46, 1
      %p378 = por %p376, %p377
      %p380 = scmp.ne.s32.totalorder %s365, %s379
      %p381 = scmp.eq.s32.totalorder %s46, 0
      %p382 = por %p380, %p381
      %s384 = sadd.s32 %s383, 1
      %p387 = scmp.eq.s32.totalorder %s40, 1
      %p388 = scmp.ne.s32.totalorder %s383, %s385
      %p389 = scmp.eq.s32.totalorder %s40, 0
      %p390 = por %p388, %p389
      %p391 = scmp.ne.s32.totalorder %s383, %s385
      %p392 = scmp.eq.s32.totalorder %s45, 1
      %p393 = por %p391, %p392
      %p394 = scmp.ne.s32.totalorder %s385, %s386
      %p395 = scmp.eq.s32.totalorder %s45, 0
      %p396 = por %p394, %p395
      %p397 = scmp.ne.s32.totalorder %s385, %s386
      %p398 = scmp.eq.s32.totalorder %s46, 1
      %p399 = por %p397, %p398
      %p401 = scmp.ne.s32.totalorder %s386, %s400
      %p402 = scmp.eq.s32.totalorder %s46, 0
      %p403 = por %p401, %p402
      %s405 = sadd.s32 %s404, 1
      %p408 = scmp.eq.s32.totalorder %s40, 1
      %p409 = scmp.ne.s32.totalorder %s404, %s406
      %p410 = scmp.eq.s32.totalorder %s40, 0
      %p411 = por %p409, %p410
      %p412 = scmp.ne.s32.totalorder %s404, %s406
      %p413 = scmp.eq.s32.totalorder %s45, 1
      %p414 = por %p412, %p413
      %p415 = scmp.ne.s32.totalorder %s406, %s407
      %p416 = scmp.eq.s32.totalorder %s45, 0
      %p417 = por %p415, %p416
      %p418 = scmp.ne.s32.totalorder %s406, %s407
      %p419 = scmp.eq.s32.totalorder %s46, 1
      %p420 = por %p418, %p419
      %p422 = scmp.ne.s32.totalorder %s407, %s421
      %p423 = scmp.eq.s32.totalorder %s46, 0
      %p424 = por %p422, %p423
      %s426 = sadd.s32 %s425, 1
      %p429 = scmp.eq.s32.totalorder %s40, 1
      %p430 = scmp.ne.s32.totalorder %s425, %s427
      %p431 = scmp.eq.s32.totalorder %s40, 0
      %p432 = por %p430, %p431
      %p433 = scmp.ne.s32.totalorder %s425, %s427
      %p434 = scmp.eq.s32.totalorder %s45, 1
      %p435 = por %p433, %p434
      %p436 = scmp.ne.s32.totalorder %s427, %s428
      %p437 = scmp.eq.s32.totalorder %s45, 0
      %p438 = por %p436, %p437
      %p439 = scmp.ne.s32.totalorder %s427, %s428
      %p440 = scmp.eq.s32.totalorder %s46, 1
      %p441 = por %p439, %p440
      %p443 = scmp.ne.s32.totalorder %s428, %s442
      %p444 = scmp.eq.s32.totalorder %s46, 0
      %p445 = por %p443, %p444
      %s447 = sadd.s32 %s446, 1
      %p450 = scmp.eq.s32.totalorder %s40, 1
      %p451 = scmp.ne.s32.totalorder %s446, %s448
      %p452 = scmp.eq.s32.totalorder %s40, 0
      %p453 = por %p451, %p452
      %p454 = scmp.ne.s32.totalorder %s446, %s448
      %p455 = scmp.eq.s32.totalorder %s45, 1
      %p456 = por %p454, %p455
      %p457 = scmp.ne.s32.totalorder %s448, %s449
      %p458 = scmp.eq.s32.totalorder %s45, 0
      %p459 = por %p457, %p458
      %p460 = scmp.ne.s32.totalorder %s448, %s449
      %p461 = scmp.eq.s32.totalorder %s46, 1
      %p462 = por %p460, %p461
      %p464 = scmp.ne.s32.totalorder %s449, %s463
      %p465 = scmp.eq.s32.totalorder %s46, 0
      %p466 = por %p464, %p465
      %s468 = sadd.s32 %s467, 1
      %p471 = scmp.eq.s32.totalorder %s40, 1
      %p472 = scmp.ne.s32.totalorder %s467, %s469
      %p473 = scmp.eq.s32.totalorder %s40, 0
      %p474 = por %p472, %p473
      %p475 = scmp.ne.s32.totalorder %s467, %s469
      %p476 = scmp.eq.s32.totalorder %s45, 1
      %p477 = por %p475, %p476
      %p478 = scmp.ne.s32.totalorder %s469, %s470
      %p479 = scmp.eq.s32.totalorder %s45, 0
      %p480 = por %p478, %p479
      %p481 = scmp.ne.s32.totalorder %s469, %s470
      %p482 = scmp.eq.s32.totalorder %s46, 1
      %p483 = por %p481, %p482
      %p485 = scmp.ne.s32.totalorder %s470, %s484
      %p486 = scmp.eq.s32.totalorder %s46, 0
      %p487 = por %p485, %p486
      %s488 = ssub.s32 %s40, %s47
      %p489 = scmp.eq.s32.totalorder %s488, 0
      %s491 = sadd.s32 %s490, 1
      %s492 = scalar_select %p489, %s490, %s491
      %p495 = pneg %p489
      %p496 = scmp.eq.s32.totalorder %s40, 1
      %p497 = por %p495, %p496
      %p498 = scmp.ne.s32.totalorder %s490, %s493
      %p499 = scmp.eq.s32.totalorder %s40, 0
      %p500 = por %p498, %p499
      %p501 = scmp.ne.s32.totalorder %s490, %s493
      %p502 = scmp.eq.s32.totalorder %s45, 1
      %p503 = por %p501, %p502
      %p504 = scmp.ne.s32.totalorder %s493, %s494
      %p505 = scmp.eq.s32.totalorder %s45, 0
      %p506 = por %p504, %p505
      %p507 = scmp.ne.s32.totalorder %s493, %s494
      %p508 = scmp.eq.s32.totalorder %s46, 1
      %p509 = por %p507, %p508
      %p511 = scmp.ne.s32.totalorder %s494, %s510
      %p512 = scmp.eq.s32.totalorder %s46, 0
      %p513 = por %p511, %p512
      %s514 = ssub.s32 %s40, %s47
      %p515 = scmp.eq.s32.totalorder %s514, 0
      %s517 = sadd.s32 %s516, 1
      %s518 = scalar_select %p515, %s516, %s517
      %p521 = pneg %p515
      %p522 = scmp.eq.s32.totalorder %s40, 1
      %p523 = por %p521, %p522
      %p524 = scmp.ne.s32.totalorder %s516, %s519
      %p525 = scmp.eq.s32.totalorder %s40, 0
      %p526 = por %p524, %p525
      %p527 = scmp.ne.s32.totalorder %s516, %s519
      %p528 = scmp.eq.s32.totalorder %s45, 1
      %p529 = por %p527, %p528
      %p530 = scmp.ne.s32.totalorder %s519, %s520
      %p531 = scmp.eq.s32.totalorder %s45, 0
      %p532 = por %p530, %p531
      %p533 = scmp.ne.s32.totalorder %s519, %s520
      %p534 = scmp.eq.s32.totalorder %s46, 1
      %p535 = por %p533, %p534
      %p537 = scmp.ne.s32.totalorder %s520, %s536
      %p538 = scmp.eq.s32.totalorder %s46, 0
      %p539 = por %p537, %p538
      %p540 = scmp.le.s32.totalorder 1, %s40
      %p541 = scmp.lt.s32.totalorder %s40, 3
      %p542 = pnand %p540, %p541
      %p543 = pneg %p542
      // Predicated region
      $region9: #{tpu_custom_call.1} parent=5 // pred_check
        _
      $region10: #{tpu_custom_call.1} parent=5 // pred_check_branch
        %545 = sbr.rel (%p542) target = $region12
      $region11: #{tpu_custom_call.1} parent=5 // pred_region
        %s546 = ssub.s32 %s40, 1
        // Predicated region
        $region13: #{tpu_custom_call.1} parent=11 // pred_check
          %p547 = pneg %p165
        $region14: #{tpu_custom_call.1} parent=11 // pred_check_branch
          %549 = sbr.rel (%p547) target = $region16
        $region15: #{tpu_custom_call.1} parent=11 // pred_region
          %551 = vsyncadd [#allocation6], 0
          %s552 = sshll.u32 %s4, 4
          %s553 = int_to_ptr.hbm [resolvable:$true] %s552
          %s554 = sshll.u32 [#allocation5], 4
          %s555 = int_to_ptr.vmem [resolvable:$true] %s554
          %560 = dma.hbm_to_vmem [thread:$0]  %s553, 2048, %s555, [#allocation6], 128, 128, 8
        $region16: #{tpu_custom_call.1} parent=11 // pred_fallthru
          _
        // Predicated region
        $region17: #{tpu_custom_call.1} parent=11 // pred_check
          %p561 = pneg %p186
        $region18: #{tpu_custom_call.1} parent=11 // pred_check_branch
          %563 = sbr.rel (%p561) target = $region20
        $region19: #{tpu_custom_call.1} parent=11 // pred_region
          %565 = vsyncadd [#allocation6], 0
          %s566 = sshll.u32 %s5, 4
          %s567 = int_to_ptr.hbm [resolvable:$true] %s566
          %s568 = sshll.u32 [#allocation7], 4
          %s569 = int_to_ptr.vmem [resolvable:$true] %s568
          %574 = dma.hbm_to_vmem [thread:$0]  %s567, 2048, %s569, [#allocation6], 128, 128, 8
        $region20: #{tpu_custom_call.1} parent=11 // pred_fallthru
          _
        // Predicated region
        $region21: #{tpu_custom_call.1} parent=11 // pred_check
          %p575 = pneg %p207
        $region22: #{tpu_custom_call.1} parent=11 // pred_check_branch
          %577 = sbr.rel (%p575) target = $region24
        $region23: #{tpu_custom_call.1} parent=11 // pred_region
          %579 = vsyncadd [#allocation9], 0
          %s580 = sshll.u32 %s6, 4
          %s581 = int_to_ptr.hbm [resolvable:$true] %s580
          %s582 = sshll.u32 [#allocation8], 4
          %s583 = int_to_ptr.vmem [resolvable:$true] %s582
          %588 = dma.hbm_to_vmem [thread:$0]  %s581, 2048, %s583, [#allocation9], 128, 128, 8
        $region24: #{tpu_custom_call.1} parent=11 // pred_fallthru
          _
        // Predicated region
        $region25: #{tpu_custom_call.1} parent=11 // pred_check
          %p589 = pneg %p228
        $region26: #{tpu_custom_call.1} parent=11 // pred_check_branch
          %591 = sbr.rel (%p589) target = $region28
        $region27: #{tpu_custom_call.1} parent=11 // pred_region
          _
        $region28: #{tpu_custom_call.1} parent=11 // pred_fallthru
          _
        // Predicated region
        $region29: #{tpu_custom_call.1} parent=11 // pred_check
          %p592 = pneg %p249
        $region30: #{tpu_custom_call.1} parent=11 // pred_check_branch
          %594 = sbr.rel (%p592) target = $region32
        $region31: #{tpu_custom_call.1} parent=11 // pred_region
          _
        $region32: #{tpu_custom_call.1} parent=11 // pred_fallthru
          _
        // Predicated region
        $region33: #{tpu_custom_call.1} parent=11 // pred_check
          %p595 = pneg %p270
        $region34: #{tpu_custom_call.1} parent=11 // pred_check_branch
          %597 = sbr.rel (%p595) target = $region36
        $region35: #{tpu_custom_call.1} parent=11 // pred_region
          _
        $region36: #{tpu_custom_call.1} parent=11 // pred_fallthru
          _
        // Predicated region
        $region37: #{tpu_custom_call.1} parent=11 // pred_check
          %p598 = pneg %p291
        $region38: #{tpu_custom_call.1} parent=11 // pred_check_branch
          %600 = sbr.rel (%p598) target = $region40
        $region39: #{tpu_custom_call.1} parent=11 // pred_region
          %602 = vsyncadd [#allocation9], 0
          %s603 = sshll.u32 %s10, 4
          %s604 = int_to_ptr.hbm [resolvable:$true] %s603
          %s605 = sshll.u32 [#allocation10], 4
          %s606 = int_to_ptr.vmem [resolvable:$true] %s605
          %611 = dma.hbm_to_vmem [thread:$0]  %s604, 2048, %s606, [#allocation9], 128, 128, 8
        $region40: #{tpu_custom_call.1} parent=11 // pred_fallthru
          _
        // Predicated region
        $region41: #{tpu_custom_call.1} parent=11 // pred_check
          %p612 = pneg %p312
        $region42: #{tpu_custom_call.1} parent=11 // pred_check_branch
          %614 = sbr.rel (%p612) target = $region44
        $region43: #{tpu_custom_call.1} parent=11 // pred_region
          _
        $region44: #{tpu_custom_call.1} parent=11 // pred_fallthru
          _
        // Predicated region
        $region45: #{tpu_custom_call.1} parent=11 // pred_check
          %p615 = pneg %p333
        $region46: #{tpu_custom_call.1} parent=11 // pred_check_branch
          %617 = sbr.rel (%p615) target = $region48
        $region47: #{tpu_custom_call.1} parent=11 // pred_region
          _
        $region48: #{tpu_custom_call.1} parent=11 // pred_fallthru
          _
        // Predicated region
        $region49: #{tpu_custom_call.1} parent=11 // pred_check
          %p618 = pneg %p354
        $region50: #{tpu_custom_call.1} parent=11 // pred_check_branch
          %620 = sbr.rel (%p618) target = $region52
        $region51: #{tpu_custom_call.1} parent=11 // pred_region
          _
        $region52: #{tpu_custom_call.1} parent=11 // pred_fallthru
          _
        // Predicated region
        $region53: #{tpu_custom_call.1} parent=11 // pred_check
          %p621 = pneg %p375
        $region54: #{tpu_custom_call.1} parent=11 // pred_check_branch
          %623 = sbr.rel (%p621) target = $region56
        $region55: #{tpu_custom_call.1} parent=11 // pred_region
          %625 = vsyncadd [#allocation12], 0
          %s626 = sshll.u32 %s14, 4
          %s627 = int_to_ptr.hbm [resolvable:$true] %s626
          %s628 = sshll.u32 [#allocation11], 4
          %s629 = int_to_ptr.vmem [resolvable:$true] %s628
          %634 = dma.hbm_to_vmem [thread:$0]  %s627, 4096, %s629, [#allocation12], 256, 256, 16
        $region56: #{tpu_custom_call.1} parent=11 // pred_fallthru
          _
        // Predicated region
        $region57: #{tpu_custom_call.1} parent=11 // pred_check
          %p635 = pneg %p396
        $region58: #{tpu_custom_call.1} parent=11 // pred_check_branch
          %637 = sbr.rel (%p635) target = $region60
        $region59: #{tpu_custom_call.1} parent=11 // pred_region
          _
        $region60: #{tpu_custom_call.1} parent=11 // pred_fallthru
          _
        // Predicated region
        $region61: #{tpu_custom_call.1} parent=11 // pred_check
          %p638 = pneg %p417
        $region62: #{tpu_custom_call.1} parent=11 // pred_check_branch
          %640 = sbr.rel (%p638) target = $region64
        $region63: #{tpu_custom_call.1} parent=11 // pred_region
          %642 = vsyncadd [#allocation12], 0
          %s643 = sshll.u32 %s16, 4
          %s644 = int_to_ptr.hbm [resolvable:$true] %s643
          %s645 = sshll.u32 [#allocation13], 4
          %s646 = int_to_ptr.vmem [resolvable:$true] %s645
          %651 = dma.hbm_to_vmem [thread:$0]  %s644, 4096, %s646, [#allocation12], 128, 128, 8
        $region64: #{tpu_custom_call.1} parent=11 // pred_fallthru
          _
        // Predicated region
        $region65: #{tpu_custom_call.1} parent=11 // pred_check
          %p652 = pneg %p438
        $region66: #{tpu_custom_call.1} parent=11 // pred_check_branch
          %654 = sbr.rel (%p652) target = $region68
        $region67: #{tpu_custom_call.1} parent=11 // pred_region
          _
        $region68: #{tpu_custom_call.1} parent=11 // pred_fallthru
          _
        // Predicated region
        $region69: #{tpu_custom_call.1} parent=11 // pred_check
          %p655 = pneg %p459
        $region70: #{tpu_custom_call.1} parent=11 // pred_check_branch
          %657 = sbr.rel (%p655) target = $region72
        $region71: #{tpu_custom_call.1} parent=11 // pred_region
          _
        $region72: #{tpu_custom_call.1} parent=11 // pred_fallthru
          _
        // Predicated region
        $region73: #{tpu_custom_call.1} parent=11 // pred_check
          %p658 = pneg %p480
        $region74: #{tpu_custom_call.1} parent=11 // pred_check_branch
          %660 = sbr.rel (%p658) target = $region76
        $region75: #{tpu_custom_call.1} parent=11 // pred_region
          _
        $region76: #{tpu_custom_call.1} parent=11 // pred_fallthru
          _
      $region12: #{tpu_custom_call.1} parent=5 // pred_fallthru
        _
      %p661 = scmp.lt.s32.totalorder %s40, 2
      // Predicated region
      $region77: #{tpu_custom_call.1} parent=5 // pred_check
        %p662 = pneg %p661
      $region78: #{tpu_custom_call.1} parent=5 // pred_check_branch
        %664 = sbr.rel (%p662) target = $region80
      $region79: #{tpu_custom_call.1} parent=5 // pred_region
        // Predicated region
        $region81: #{tpu_custom_call.1} parent=79 // pred_check
          %p665 = pneg %p60
        $region82: #{tpu_custom_call.1} parent=79 // pred_check_branch
          %667 = sbr.rel (%p665) target = $region84
        $region83: #{tpu_custom_call.1} parent=79 // pred_region
          %s668 = sand.u32 %s50, 1
          %s669 = scalar_lea.sflag [#allocation3], %s668
          %s670 = sand.u32 %s50, 1
          %s671 = smul.addr %s670, 16
          %s672 = scalar_lea.vmem [#allocation2], %s671
          %674 = vsyncadd %s669, 0
          %s675 = smul.addr %s40, 2
          %s676 = smul.addr %s675, 8
          %s677 = scalar_lea.hbm %s0, %s676
          %s678 = sshll.u32 %s677, 4
          %s679 = int_to_ptr.hbm [resolvable:$true] %s678
          %s680 = sshll.u32 %s672, 4
          %s681 = int_to_ptr.vmem [resolvable:$true] %s680
          %686 = dma.hbm_to_vmem [thread:$0]  %s679, 256, %s681, %s669, 128, 128, 8
        $region84: #{tpu_custom_call.1} parent=79 // pred_fallthru
          _
        // Predicated region
        $region85: #{tpu_custom_call.1} parent=79 // pred_check
          %p687 = pneg %p86
        $region86: #{tpu_custom_call.1} parent=79 // pred_check_branch
          %689 = sbr.rel (%p687) target = $region88
        $region87: #{tpu_custom_call.1} parent=79 // pred_region
          %p690 = scmp.lt.s32.totalorder %s40, 1
          %s691 = scalar_select %p690, %s40, 1
          %s692 = smul.addr %s691, 4
          %s693 = smul.addr %s692, 8
          %s694 = scalar_lea.vmem %s1, %s693
        $region88: #{tpu_custom_call.1} parent=79 // pred_fallthru
          _
        // Predicated region
        $region89: #{tpu_custom_call.1} parent=79 // pred_check
          %p695 = pneg %p112
        $region90: #{tpu_custom_call.1} parent=79 // pred_check_branch
          %697 = sbr.rel (%p695) target = $region92
        $region91: #{tpu_custom_call.1} parent=79 // pred_region
          %p698 = scmp.lt.s32.totalorder %s40, 1
          %s699 = scalar_select %p698, %s40, 1
          %s700 = smul.addr %s699, 2
          %s701 = smul.addr %s700, 8
          %s702 = scalar_lea.vmem %s2, %s701
        $region92: #{tpu_custom_call.1} parent=79 // pred_fallthru
          _
        // Predicated region
        $region93: #{tpu_custom_call.1} parent=79 // pred_check
          %p703 = pneg %p138
        $region94: #{tpu_custom_call.1} parent=79 // pred_check_branch
          %705 = sbr.rel (%p703) target = $region96
        $region95: #{tpu_custom_call.1} parent=79 // pred_region
          %p706 = scmp.lt.s32.totalorder %s40, 1
          %s707 = scalar_select %p706, %s40, 1
          %s708 = smul.addr %s707, 2
          %s709 = smul.addr %s708, 8
          %s710 = scalar_lea.vmem %s3, %s709
        $region96: #{tpu_custom_call.1} parent=79 // pred_fallthru
          _
      $region80: #{tpu_custom_call.1} parent=5 // pred_fallthru
        _
      %p711 = scmp.le.s32.totalorder 1, %s40
      %p712 = scmp.lt.s32.totalorder %s40, 3
      %p713 = pnand %p711, %p712
      %p714 = pneg %p713
      // Predicated region
      $region97: #{tpu_custom_call.1} parent=5 // pred_check
        _
      $region98: #{tpu_custom_call.1} parent=5 // pred_check_branch
        %716 = sbr.rel (%p713) target = $region100
      $region99: #{tpu_custom_call.1} parent=5 // pred_region
        %s717 = ssub.s32 %s40, 1
        %s718 = sand.u32 %s53, 1
        %s719 = scalar_lea.sflag [#allocation3], %s718
        %s720 = sand.u32 %s53, 1
        %s721 = smul.addr %s720, 16
        %s722 = scalar_lea.vmem [#allocation2], %s721
        // Predicated region
        $region101: #{tpu_custom_call.1} parent=99 // pred_check
          %p723 = pneg %p66
        $region102: #{tpu_custom_call.1} parent=99 // pred_check_branch
          %725 = sbr.rel (%p723) target = $region104
        $region103: #{tpu_custom_call.1} parent=99 // pred_region
          %727 = dma.done %s719, 256
        $region104: #{tpu_custom_call.1} parent=99 // pred_fallthru
          _
        // Predicated region
        $region105: #{tpu_custom_call.1} parent=99 // pred_check
          %p728 = pneg %p165
        $region106: #{tpu_custom_call.1} parent=99 // pred_check_branch
          %730 = sbr.rel (%p728) target = $region108
        $region107: #{tpu_custom_call.1} parent=99 // pred_region
          %732 = dma.done [#allocation6], 2048
        $region108: #{tpu_custom_call.1} parent=99 // pred_fallthru
          _
        // Predicated region
        $region109: #{tpu_custom_call.1} parent=99 // pred_check
          %p733 = pneg %p186
        $region110: #{tpu_custom_call.1} parent=99 // pred_check_branch
          %735 = sbr.rel (%p733) target = $region112
        $region111: #{tpu_custom_call.1} parent=99 // pred_region
          %737 = dma.done [#allocation6], 2048
        $region112: #{tpu_custom_call.1} parent=99 // pred_fallthru
          _
        // Predicated region
        $region113: #{tpu_custom_call.1} parent=99 // pred_check
          %p738 = pneg %p207
        $region114: #{tpu_custom_call.1} parent=99 // pred_check_branch
          %740 = sbr.rel (%p738) target = $region116
        $region115: #{tpu_custom_call.1} parent=99 // pred_region
          %742 = dma.done [#allocation9], 2048
        $region116: #{tpu_custom_call.1} parent=99 // pred_fallthru
          _
        // Predicated region
        $region117: #{tpu_custom_call.1} parent=99 // pred_check
          %p743 = pneg %p291
        $region118: #{tpu_custom_call.1} parent=99 // pred_check_branch
          %745 = sbr.rel (%p743) target = $region120
        $region119: #{tpu_custom_call.1} parent=99 // pred_region
          %747 = dma.done [#allocation9], 2048
        $region120: #{tpu_custom_call.1} parent=99 // pred_fallthru
          _
        // Predicated region
        $region121: #{tpu_custom_call.1} parent=99 // pred_check
          %p748 = pneg %p375
        $region122: #{tpu_custom_call.1} parent=99 // pred_check_branch
          %750 = sbr.rel (%p748) target = $region124
        $region123: #{tpu_custom_call.1} parent=99 // pred_region
          %752 = dma.done [#allocation12], 4096
        $region124: #{tpu_custom_call.1} parent=99 // pred_fallthru
          _
        // Predicated region
        $region125: #{tpu_custom_call.1} parent=99 // pred_check
          %p753 = pneg %p417
        $region126: #{tpu_custom_call.1} parent=99 // pred_check_branch
          %755 = sbr.rel (%p753) target = $region128
        $region127: #{tpu_custom_call.1} parent=99 // pred_region
          %757 = dma.done [#allocation12], 4096
        $region128: #{tpu_custom_call.1} parent=99 // pred_fallthru
          _
        %s758 = sand.u32 %s53, 1
        %s759 = scalar_lea.sflag [#allocation3], %s758
        %s760 = sand.u32 %s53, 1
        %s761 = smul.addr %s760, 16
        %s762 = scalar_lea.vmem [#allocation2], %s761
        %p763 = pneg %p66
        %p764 = pneg %p63
        %p765 = scmp.lt.s32.totalorder %s45, 1
        %s766 = scalar_select %p765, %s45, 1
        %s767 = smul.addr %s766, 4
        %s768 = smul.addr %s767, 8
        %s769 = scalar_lea.vmem %s1, %s768
        %p770 = pneg %p92
        %p771 = pneg %p89
        %p772 = scmp.lt.s32.totalorder %s45, 1
        %s773 = scalar_select %p772, %s45, 1
        %s774 = smul.addr %s773, 2
        %s775 = smul.addr %s774, 8
        %s776 = scalar_lea.vmem %s2, %s775
        %p777 = pneg %p118
        %p778 = pneg %p115
        %p779 = scmp.lt.s32.totalorder %s45, 1
        %s780 = scalar_select %p779, %s45, 1
        %s781 = smul.addr %s780, 2
        %s782 = smul.addr %s781, 8
        %s783 = scalar_lea.vmem %s3, %s782
        %p784 = pneg %p144
        %p785 = pneg %p141
        %p786 = pneg %p165
        %p787 = pneg %p162
        %p788 = pneg %p186
        %p789 = pneg %p183
        %p790 = pneg %p207
        %p791 = pneg %p204
        %p792 = pneg %p228
        %p793 = pneg %p225
        %p794 = pneg %p249
        %p795 = pneg %p246
        %p796 = pneg %p270
        %p797 = pneg %p267
        %p798 = pneg %p291
        %p799 = pneg %p288
        %p800 = pneg %p312
        %p801 = pneg %p309
        %p802 = pneg %p333
        %p803 = pneg %p330
        %p804 = pneg %p354
        %p805 = pneg %p351
        %p806 = pneg %p375
        %p807 = pneg %p372
        %p808 = pneg %p396
        %p809 = pneg %p393
        %p810 = pneg %p417
        %p811 = pneg %p414
        %p812 = pneg %p438
        %p813 = pneg %p435
        %p814 = pneg %p459
        %p815 = pneg %p456
        %p816 = pneg %p480
        %p817 = pneg %p477
        %p818 = pneg %p506
        %p819 = pneg %p503
        %s820 = sand.u32 %s493, 1
        %s821 = scalar_lea.sflag [#allocation4], %s820
        %s822 = sand.u32 %s493, 1
        %s823 = smul.addr %s822, 16
        %s824 = scalar_lea.vmem [#allocation14], %s823
        %p825 = pneg %p532
        %p826 = pneg %p529
        %s827 = sand.u32 %s519, 1
        %s828 = scalar_lea.sflag [#allocation16], %s827
        %s829 = sand.u32 %s519, 1
        %s830 = smul.addr %s829, 16
        %s831 = scalar_lea.vmem [#allocation15], %s830
        %p832 = scmp.lt.s32.totalorder %s45, 1
        %s833 = scalar_select %p832, %s45, 1
        %s834 = smul.addr %s833, 4
        %s835 = smul.addr %s834, 8
        %s836 = scalar_lea.vmem %s1, %s835
        %p837 = scmp.lt.s32.totalorder %s45, 1
        %s838 = scalar_select %p837, %s45, 1
        %s839 = smul.addr %s838, 2
        %s840 = smul.addr %s839, 8
        %s841 = scalar_lea.vmem %s2, %s840
        %p842 = scmp.lt.s32.totalorder %s45, 1
        %s843 = scalar_select %p842, %s45, 1
        %s844 = smul.addr %s843, 2
        %s845 = smul.addr %s844, 8
        %s846 = scalar_lea.vmem %s3, %s845
        %v847 = vld [vmem:[%s722] sm:$0xff]
        %v848 = vld [vmem:[%s722 + $0x8] sm:$0xff]
        %v849 = vld [vmem:[%s836] sm:$0xff]
        %v850 = vld [vmem:[%s836 + $0x8] sm:$0xff]
        %v851 = vld [vmem:[%s836 + $0x10] sm:$0xff]
        %v852 = vld [vmem:[%s836 + $0x18] sm:$0xff]
        %v853 = vld [vmem:[#allocation5] sm:$0xff]
        %v854 = vld [vmem:[#allocation5 + $0x8] sm:$0xff]
        %v855 = vld [vmem:[#allocation5 + $0x10] sm:$0xff]
        %v856 = vld [vmem:[#allocation5 + $0x18] sm:$0xff]
        %v857 = vld [vmem:[#allocation5 + $0x20] sm:$0xff]
        %v858 = vld [vmem:[#allocation5 + $0x28] sm:$0xff]
        %v859 = vld [vmem:[#allocation5 + $0x30] sm:$0xff]
        %v860 = vld [vmem:[#allocation5 + $0x38] sm:$0xff]
        %v861 = vld [vmem:[#allocation5 + $0x40] sm:$0xff]
        %v862 = vld [vmem:[#allocation5 + $0x48] sm:$0xff]
        %v863 = vld [vmem:[#allocation5 + $0x50] sm:$0xff]
        %v864 = vld [vmem:[#allocation5 + $0x58] sm:$0xff]
        %v865 = vld [vmem:[#allocation5 + $0x60] sm:$0xff]
        %v866 = vld [vmem:[#allocation5 + $0x68] sm:$0xff]
        %v867 = vld [vmem:[#allocation5 + $0x70] sm:$0xff]
        %v868 = vld [vmem:[#allocation5 + $0x78] sm:$0xff]
        %v869 = vld [vmem:[%s7] sm:$0x1]
        %v871 = vperm.slane %v869, 0
        %873 = vmatpush.msra.mxu0 %v868
        %874 = vmatpush.msra.mxu0 %v867
        %875 = vmatpush.msra.mxu0 %v866
        %876 = vmatpush.msra.mxu0 %v865
        %877 = vmatpush.msra.mxu0 %v864
        %878 = vmatpush.msra.mxu0 %v863
        %879 = vmatpush.msra.mxu0 %v862
        %880 = vmatpush.msra.mxu0 %v861
        %881 = vmatpush.msra.mxu0 %v860
        %882 = vmatpush.msra.mxu0 %v859
        %883 = vmatpush.msra.mxu0 %v858
        %884 = vmatpush.msra.mxu0 %v857
        %885 = vmatpush.msra.mxu0 %v856
        %886 = vmatpush.msra.mxu0 %v855
        %887 = vmatpush.msra.mxu0 %v854
        %888 = vmatpush.msra.mxu0 %v853
        %889 = vmatmul.f32.gmra.mxu0 %v847
        %v890 = vpop.f32.mrf.mxu0
        %v891 = vadd.f32 %v871, %v890
        %892 = vmatmul.f32.gmra.mxu0 %v848
        %v893 = vpop.f32.mrf.mxu0
        %v894 = vadd.f32 %v871, %v893
        %895 = vdwg.mxu0
        %v896 = vld [vmem:[#allocation7] sm:$0xff]
        %v897 = vld [vmem:[#allocation7 + $0x8] sm:$0xff]
        %v898 = vld [vmem:[#allocation7 + $0x10] sm:$0xff]
        %v899 = vld [vmem:[#allocation7 + $0x18] sm:$0xff]
        %v900 = vld [vmem:[#allocation7 + $0x20] sm:$0xff]
        %v901 = vld [vmem:[#allocation7 + $0x28] sm:$0xff]
        %v902 = vld [vmem:[#allocation7 + $0x30] sm:$0xff]
        %v903 = vld [vmem:[#allocation7 + $0x38] sm:$0xff]
        %v904 = vld [vmem:[#allocation7 + $0x40] sm:$0xff]
        %v905 = vld [vmem:[#allocation7 + $0x48] sm:$0xff]
        %v906 = vld [vmem:[#allocation7 + $0x50] sm:$0xff]
        %v907 = vld [vmem:[#allocation7 + $0x58] sm:$0xff]
        %v908 = vld [vmem:[#allocation7 + $0x60] sm:$0xff]
        %v909 = vld [vmem:[#allocation7 + $0x68] sm:$0xff]
        %v910 = vld [vmem:[#allocation7 + $0x70] sm:$0xff]
        %v911 = vld [vmem:[#allocation7 + $0x78] sm:$0xff]
        %v912 = vld [vmem:[%s8] sm:$0x1]
        %v914 = vperm.slane %v912, 0
        %916 = vmatpush.msra.mxu0 %v911
        %917 = vmatpush.msra.mxu0 %v910
        %918 = vmatpush.msra.mxu0 %v909
        %919 = vmatpush.msra.mxu0 %v908
        %920 = vmatpush.msra.mxu0 %v907
        %921 = vmatpush.msra.mxu0 %v906
        %922 = vmatpush.msra.mxu0 %v905
        %923 = vmatpush.msra.mxu0 %v904
        %924 = vmatpush.msra.mxu0 %v903
        %925 = vmatpush.msra.mxu0 %v902
        %926 = vmatpush.msra.mxu0 %v901
        %927 = vmatpush.msra.mxu0 %v900
        %928 = vmatpush.msra.mxu0 %v899
        %929 = vmatpush.msra.mxu0 %v898
        %930 = vmatpush.msra.mxu0 %v897
        %931 = vmatpush.msra.mxu0 %v896
        %932 = vmatmul.f32.gmra.mxu0 %v849
        %v933 = vpop.f32.mrf.mxu0
        %v934 = vadd.f32 %v914, %v933
        %935 = vmatmul.f32.gmra.mxu0 %v850
        %v936 = vpop.f32.mrf.mxu0
        %v937 = vadd.f32 %v914, %v936
        %938 = vmatmul.f32.gmra.mxu0 %v851
        %v939 = vpop.f32.mrf.mxu0
        %v940 = vadd.f32 %v914, %v939
        %941 = vmatmul.f32.gmra.mxu0 %v852
        %v942 = vpop.f32.mrf.mxu0
        %v943 = vadd.f32 %v914, %v942
        %944 = vdwg.mxu0
        %v945 = vld [vmem:[#allocation8] sm:$0xff]
        %v946 = vld [vmem:[#allocation8 + $0x8] sm:$0xff]
        %v947 = vld [vmem:[#allocation8 + $0x10] sm:$0xff]
        %v948 = vld [vmem:[#allocation8 + $0x18] sm:$0xff]
        %v949 = vld [vmem:[#allocation8 + $0x20] sm:$0xff]
        %v950 = vld [vmem:[#allocation8 + $0x28] sm:$0xff]
        %v951 = vld [vmem:[#allocation8 + $0x30] sm:$0xff]
        %v952 = vld [vmem:[#allocation8 + $0x38] sm:$0xff]
        %v953 = vld [vmem:[#allocation8 + $0x40] sm:$0xff]
        %v954 = vld [vmem:[#allocation8 + $0x48] sm:$0xff]
        %v955 = vld [vmem:[#allocation8 + $0x50] sm:$0xff]
        %v956 = vld [vmem:[#allocation8 + $0x58] sm:$0xff]
        %v957 = vld [vmem:[#allocation8 + $0x60] sm:$0xff]
        %v958 = vld [vmem:[#allocation8 + $0x68] sm:$0xff]
        %v959 = vld [vmem:[#allocation8 + $0x70] sm:$0xff]
        %v960 = vld [vmem:[#allocation8 + $0x78] sm:$0xff]
        %v961 = vld [vmem:[%s9] sm:$0x1]
        %v963 = vperm.slane %v961, 0
        %965 = vmatpush.msra.mxu0 %v960
        %966 = vmatpush.msra.mxu0 %v959
        %967 = vmatpush.msra.mxu0 %v958
        %968 = vmatpush.msra.mxu0 %v957
        %969 = vmatpush.msra.mxu0 %v956
        %970 = vmatpush.msra.mxu0 %v955
        %971 = vmatpush.msra.mxu0 %v954
        %972 = vmatpush.msra.mxu0 %v953
        %973 = vmatpush.msra.mxu0 %v952
        %974 = vmatpush.msra.mxu0 %v951
        %975 = vmatpush.msra.mxu0 %v950
        %976 = vmatpush.msra.mxu0 %v949
        %977 = vmatpush.msra.mxu0 %v948
        %978 = vmatpush.msra.mxu0 %v947
        %979 = vmatpush.msra.mxu0 %v946
        %980 = vmatpush.msra.mxu0 %v945
        %981 = vmatmul.f32.gmra.mxu0 %v849
        %v982 = vpop.f32.mrf.mxu0
        %v983 = vadd.f32 %v963, %v982
        %984 = vmatmul.f32.gmra.mxu0 %v850
        %v985 = vpop.f32.mrf.mxu0
        %v986 = vadd.f32 %v963, %v985
        %987 = vmatmul.f32.gmra.mxu0 %v851
        %v988 = vpop.f32.mrf.mxu0
        %v989 = vadd.f32 %v963, %v988
        %990 = vmatmul.f32.gmra.mxu0 %v852
        %v991 = vpop.f32.mrf.mxu0
        %v992 = vadd.f32 %v963, %v991
        %993 = vdwg.mxu0
        %996 = vrot.lane.b32.xlu0 %v891, 96
        %v997 = vpop.permute.xlu0 %996
        %998 = vrot.lane.b32.xlu0 %v894, 96
        %v999 = vpop.permute.xlu0 %998
        %1000 = vrot.lane.b32.xlu0 %v891, 64
        %v1001 = vpop.permute.xlu0 %1000
        %1002 = vrot.lane.b32.xlu0 %v894, 64
        %v1003 = vpop.permute.xlu0 %1002
        %1004 = vrot.lane.b32.xlu0 %v891, 32
        %v1005 = vpop.permute.xlu0 %1004
        %1006 = vrot.lane.b32.xlu0 %v894, 32
        %v1007 = vpop.permute.xlu0 %1006
        %1012 = vrot.lane.b32.xlu0 %v934, 96
        %v1013 = vpop.permute.xlu0 %1012
        %1014 = vrot.lane.b32.xlu0 %v937, 96
        %v1015 = vpop.permute.xlu0 %1014
        %1016 = vrot.lane.b32.xlu0 %v940, 96
        %v1017 = vpop.permute.xlu0 %1016
        %1018 = vrot.lane.b32.xlu0 %v943, 96
        %v1019 = vpop.permute.xlu0 %1018
        %1024 = vrot.lane.b32.xlu0 %v934, 64
        %v1025 = vpop.permute.xlu0 %1024
        %1026 = vrot.lane.b32.xlu0 %v937, 64
        %v1027 = vpop.permute.xlu0 %1026
        %1028 = vrot.lane.b32.xlu0 %v940, 64
        %v1029 = vpop.permute.xlu0 %1028
        %1030 = vrot.lane.b32.xlu0 %v943, 64
        %v1031 = vpop.permute.xlu0 %1030
        %1036 = vrot.lane.b32.xlu0 %v934, 32
        %v1037 = vpop.permute.xlu0 %1036
        %1038 = vrot.lane.b32.xlu0 %v937, 32
        %v1039 = vpop.permute.xlu0 %1038
        %1040 = vrot.lane.b32.xlu0 %v940, 32
        %v1041 = vpop.permute.xlu0 %1040
        %1042 = vrot.lane.b32.xlu0 %v943, 32
        %v1043 = vpop.permute.xlu0 %1042
        %1052 = vrot.lane.b32.xlu0 %v983, 96
        %v1053 = vpop.permute.xlu0 %1052
        %1054 = vrot.lane.b32.xlu0 %v986, 96
        %v1055 = vpop.permute.xlu0 %1054
        %1056 = vrot.lane.b32.xlu0 %v989, 96
        %v1057 = vpop.permute.xlu0 %1056
        %1058 = vrot.lane.b32.xlu0 %v992, 96
        %v1059 = vpop.permute.xlu0 %1058
        %1064 = vrot.lane.b32.xlu0 %v983, 64
        %v1065 = vpop.permute.xlu0 %1064
        %1066 = vrot.lane.b32.xlu0 %v986, 64
        %v1067 = vpop.permute.xlu0 %1066
        %1068 = vrot.lane.b32.xlu0 %v989, 64
        %v1069 = vpop.permute.xlu0 %1068
        %1070 = vrot.lane.b32.xlu0 %v992, 64
        %v1071 = vpop.permute.xlu0 %1070
        %1076 = vrot.lane.b32.xlu0 %v983, 32
        %v1077 = vpop.permute.xlu0 %1076
        %1078 = vrot.lane.b32.xlu0 %v986, 32
        %v1079 = vpop.permute.xlu0 %1078
        %1080 = vrot.lane.b32.xlu0 %v989, 32
        %v1081 = vpop.permute.xlu0 %1080
        %1082 = vrot.lane.b32.xlu0 %v992, 32
        %v1083 = vpop.permute.xlu0 %1082
        %1088 = vxpose.xlu0.b32.start [1/16] %v934, 128
        %1089 = vxpose.xlu0.b32.cont [2/16] %v937, 128
        %1090 = vxpose.xlu0.b32.cont [3/16] %v940, 128
        %1091 = vxpose.xlu0.b32.cont [4/16] %v943, 128
        %1092 = vxpose.xlu0.b32.cont [5/16] 0.0, 128
        %1093 = vxpose.xlu0.b32.cont [6/16] 0.0, 128
        %1094 = vxpose.xlu0.b32.cont [7/16] 0.0, 128
        %1095 = vxpose.xlu0.b32.cont [8/16] 0.0, 128
        %1096 = vxpose.xlu0.b32.cont [9/16] 0.0, 128
        %1097 = vxpose.xlu0.b32.cont [10/16] 0.0, 128
        %1098 = vxpose.xlu0.b32.cont [11/16] 0.0, 128
        %1099 = vxpose.xlu0.b32.cont [12/16] 0.0, 128
        %1100 = vxpose.xlu0.b32.cont [13/16] 0.0, 128
        %1101 = vxpose.xlu0.b32.cont [14/16] 0.0, 128
        %1102 = vxpose.xlu0.b32.cont [15/16] 0.0, 128
        %1103 = vxpose.xlu0.b32.end [16/16] 0.0, 128
        %v1104 = vpop.trf.xlu0
        %v1105 = vpop.trf.xlu0
        %v1106 = vpop.trf.xlu0
        %v1107 = vpop.trf.xlu0
        %v1108 = vpop.trf.xlu0
        %v1109 = vpop.trf.xlu0
        %v1110 = vpop.trf.xlu0
        %v1111 = vpop.trf.xlu0
        %v1112 = vpop.trf.xlu0
        %v1113 = vpop.trf.xlu0
        %v1114 = vpop.trf.xlu0
        %v1115 = vpop.trf.xlu0
        %v1116 = vpop.trf.xlu0
        %v1117 = vpop.trf.xlu0
        %v1118 = vpop.trf.xlu0
        %v1119 = vpop.trf.xlu0
        %1120 = vxpose.xlu0.b32.start [1/16] %v1013, 128
        %1121 = vxpose.xlu0.b32.cont [2/16] %v1015, 128
        %1122 = vxpose.xlu0.b32.cont [3/16] %v1017, 128
        %1123 = vxpose.xlu0.b32.cont [4/16] %v1019, 128
        %1124 = vxpose.xlu0.b32.cont [5/16] 0.0, 128
        %1125 = vxpose.xlu0.b32.cont [6/16] 0.0, 128
        %1126 = vxpose.xlu0.b32.cont [7/16] 0.0, 128
        %1127 = vxpose.xlu0.b32.cont [8/16] 0.0, 128
        %1128 = vxpose.xlu0.b32.cont [9/16] 0.0, 128
        %1129 = vxpose.xlu0.b32.cont [10/16] 0.0, 128
        %1130 = vxpose.xlu0.b32.cont [11/16] 0.0, 128
        %1131 = vxpose.xlu0.b32.cont [12/16] 0.0, 128
        %1132 = vxpose.xlu0.b32.cont [13/16] 0.0, 128
        %1133 = vxpose.xlu0.b32.cont [14/16] 0.0, 128
        %1134 = vxpose.xlu0.b32.cont [15/16] 0.0, 128
        %1135 = vxpose.xlu0.b32.end [16/16] 0.0, 128
        %v1136 = vpop.trf.xlu0
        %v1137 = vpop.trf.xlu0
        %v1138 = vpop.trf.xlu0
        %v1139 = vpop.trf.xlu0
        %v1140 = vpop.trf.xlu0
        %v1141 = vpop.trf.xlu0
        %v1142 = vpop.trf.xlu0
        %v1143 = vpop.trf.xlu0
        %v1144 = vpop.trf.xlu0
        %v1145 = vpop.trf.xlu0
        %v1146 = vpop.trf.xlu0
        %v1147 = vpop.trf.xlu0
        %v1148 = vpop.trf.xlu0
        %v1149 = vpop.trf.xlu0
        %v1150 = vpop.trf.xlu0
        %v1151 = vpop.trf.xlu0
        %1152 = vxpose.xlu0.b32.start [1/16] %v1025, 128
        %1153 = vxpose.xlu0.b32.cont [2/16] %v1027, 128
        %1154 = vxpose.xlu0.b32.cont [3/16] %v1029, 128
        %1155 = vxpose.xlu0.b32.cont [4/16] %v1031, 128
        %1156 = vxpose.xlu0.b32.cont [5/16] 0.0, 128
        %1157 = vxpose.xlu0.b32.cont [6/16] 0.0, 128
        %1158 = vxpose.xlu0.b32.cont [7/16] 0.0, 128
        %1159 = vxpose.xlu0.b32.cont [8/16] 0.0, 128
        %1160 = vxpose.xlu0.b32.cont [9/16] 0.0, 128
        %1161 = vxpose.xlu0.b32.cont [10/16] 0.0, 128
        %1162 = vxpose.xlu0.b32.cont [11/16] 0.0, 128
        %1163 = vxpose.xlu0.b32.cont [12/16] 0.0, 128
        %1164 = vxpose.xlu0.b32.cont [13/16] 0.0, 128
        %1165 = vxpose.xlu0.b32.cont [14/16] 0.0, 128
        %1166 = vxpose.xlu0.b32.cont [15/16] 0.0, 128
        %1167 = vxpose.xlu0.b32.end [16/16] 0.0, 128
        %v1168 = vpop.trf.xlu0
        %v1169 = vpop.trf.xlu0
        %v1170 = vpop.trf.xlu0
        %v1171 = vpop.trf.xlu0
        %v1172 = vpop.trf.xlu0
        %v1173 = vpop.trf.xlu0
        %v1174 = vpop.trf.xlu0
        %v1175 = vpop.trf.xlu0
        %v1176 = vpop.trf.xlu0
        %v1177 = vpop.trf.xlu0
        %v1178 = vpop.trf.xlu0
        %v1179 = vpop.trf.xlu0
        %v1180 = vpop.trf.xlu0
        %v1181 = vpop.trf.xlu0
        %v1182 = vpop.trf.xlu0
        %v1183 = vpop.trf.xlu0
        %1184 = vxpose.xlu0.b32.start [1/16] %v1037, 128
        %1185 = vxpose.xlu0.b32.cont [2/16] %v1039, 128
        %1186 = vxpose.xlu0.b32.cont [3/16] %v1041, 128
        %1187 = vxpose.xlu0.b32.cont [4/16] %v1043, 128
        %1188 = vxpose.xlu0.b32.cont [5/16] 0.0, 128
        %1189 = vxpose.xlu0.b32.cont [6/16] 0.0, 128
        %1190 = vxpose.xlu0.b32.cont [7/16] 0.0, 128
        %1191 = vxpose.xlu0.b32.cont [8/16] 0.0, 128
        %1192 = vxpose.xlu0.b32.cont [9/16] 0.0, 128
        %1193 = vxpose.xlu0.b32.cont [10/16] 0.0, 128
        %1194 = vxpose.xlu0.b32.cont [11/16] 0.0, 128
        %1195 = vxpose.xlu0.b32.cont [12/16] 0.0, 128
        %1196 = vxpose.xlu0.b32.cont [13/16] 0.0, 128
        %1197 = vxpose.xlu0.b32.cont [14/16] 0.0, 128
        %1198 = vxpose.xlu0.b32.cont [15/16] 0.0, 128
        %1199 = vxpose.xlu0.b32.end [16/16] 0.0, 128
        %v1200 = vpop.trf.xlu0
        %v1201 = vpop.trf.xlu0
        %v1202 = vpop.trf.xlu0
        %v1203 = vpop.trf.xlu0
        %v1204 = vpop.trf.xlu0
        %v1205 = vpop.trf.xlu0
        %v1206 = vpop.trf.xlu0
        %v1207 = vpop.trf.xlu0
        %v1208 = vpop.trf.xlu0
        %v1209 = vpop.trf.xlu0
        %v1210 = vpop.trf.xlu0
        %v1211 = vpop.trf.xlu0
        %v1212 = vpop.trf.xlu0
        %v1213 = vpop.trf.xlu0
        %v1214 = vpop.trf.xlu0
        %v1215 = vpop.trf.xlu0
        %vm1216 = vcmask 261120
        %v1217 = vsel %vm1216, %v891, 0
        %v1219 = vsel %vm1216, %v894, 0
        %1221 = vmatpush.msra.mxu0 0.0
        %1222 = vmatpush.msra.mxu0 0.0
        %1223 = vmatpush.msra.mxu0 0.0
        %1224 = vmatpush.msra.mxu0 0.0
        %1225 = vmatpush.msra.mxu0 0.0
        %1226 = vmatpush.msra.mxu0 0.0
        %1227 = vmatpush.msra.mxu0 0.0
        %1228 = vmatpush.msra.mxu0 0.0
        %1229 = vmatpush.msra.mxu0 0.0
        %1230 = vmatpush.msra.mxu0 0.0
        %1231 = vmatpush.msra.mxu0 0.0
        %1232 = vmatpush.msra.mxu0 0.0
        %1233 = vmatpush.msra.mxu0 %v1107
        %1234 = vmatpush.msra.mxu0 %v1106
        %1235 = vmatpush.msra.mxu0 %v1105
        %1236 = vmatpush.msra.mxu0 %v1104
        %1237 = vmatmul.f32.gmra.mxu0 %v1217
        %v1238 = vpop.f32.mrf.mxu0
        %v1239 = vadd.f32 0.0, %v1238
        %1240 = vmatmul.f32.gmra.mxu0 %v1219
        %v1241 = vpop.f32.mrf.mxu0
        %v1242 = vadd.f32 0.0, %v1241
        %1243 = vdwg.mxu0
        %v1244 = vsel %vm1216, %v997, 0
        %v1246 = vsel %vm1216, %v999, 0
        %1248 = vmatpush.msra.mxu0 0.0
        %1249 = vmatpush.msra.mxu0 0.0
        %1250 = vmatpush.msra.mxu0 0.0
        %1251 = vmatpush.msra.mxu0 0.0
        %1252 = vmatpush.msra.mxu0 0.0
        %1253 = vmatpush.msra.mxu0 0.0
        %1254 = vmatpush.msra.mxu0 0.0
        %1255 = vmatpush.msra.mxu0 0.0
        %1256 = vmatpush.msra.mxu0 0.0
        %1257 = vmatpush.msra.mxu0 0.0
        %1258 = vmatpush.msra.mxu0 0.0
        %1259 = vmatpush.msra.mxu0 0.0
        %1260 = vmatpush.msra.mxu0 %v1139
        %1261 = vmatpush.msra.mxu0 %v1138
        %1262 = vmatpush.msra.mxu0 %v1137
        %1263 = vmatpush.msra.mxu0 %v1136
        %1264 = vmatmul.f32.gmra.mxu0 %v1244
        %v1265 = vpop.f32.mrf.mxu0
        %v1266 = vadd.f32 0.0, %v1265
        %1267 = vmatmul.f32.gmra.mxu0 %v1246
        %v1268 = vpop.f32.mrf.mxu0
        %v1269 = vadd.f32 0.0, %v1268
        %1270 = vdwg.mxu0
        %v1271 = vsel %vm1216, %v1001, 0
        %v1273 = vsel %vm1216, %v1003, 0
        %1275 = vmatpush.msra.mxu0 0.0
        %1276 = vmatpush.msra.mxu0 0.0
        %1277 = vmatpush.msra.mxu0 0.0
        %1278 = vmatpush.msra.mxu0 0.0
        %1279 = vmatpush.msra.mxu0 0.0
        %1280 = vmatpush.msra.mxu0 0.0
        %1281 = vmatpush.msra.mxu0 0.0
        %1282 = vmatpush.msra.mxu0 0.0
        %1283 = vmatpush.msra.mxu0 0.0
        %1284 = vmatpush.msra.mxu0 0.0
        %1285 = vmatpush.msra.mxu0 0.0
        %1286 = vmatpush.msra.mxu0 0.0
        %1287 = vmatpush.msra.mxu0 %v1171
        %1288 = vmatpush.msra.mxu0 %v1170
        %1289 = vmatpush.msra.mxu0 %v1169
        %1290 = vmatpush.msra.mxu0 %v1168
        %1291 = vmatmul.f32.gmra.mxu0 %v1271
        %v1292 = vpop.f32.mrf.mxu0
        %v1293 = vadd.f32 0.0, %v1292
        %1294 = vmatmul.f32.gmra.mxu0 %v1273
        %v1295 = vpop.f32.mrf.mxu0
        %v1296 = vadd.f32 0.0, %v1295
        %1297 = vdwg.mxu0
        %v1298 = vsel %vm1216, %v1005, 0
        %v1300 = vsel %vm1216, %v1007, 0
        %1302 = vmatpush.msra.mxu0 0.0
        %1303 = vmatpush.msra.mxu0 0.0
        %1304 = vmatpush.msra.mxu0 0.0
        %1305 = vmatpush.msra.mxu0 0.0
        %1306 = vmatpush.msra.mxu0 0.0
        %1307 = vmatpush.msra.mxu0 0.0
        %1308 = vmatpush.msra.mxu0 0.0
        %1309 = vmatpush.msra.mxu0 0.0
        %1310 = vmatpush.msra.mxu0 0.0
        %1311 = vmatpush.msra.mxu0 0.0
        %1312 = vmatpush.msra.mxu0 0.0
        %1313 = vmatpush.msra.mxu0 0.0
        %1314 = vmatpush.msra.mxu0 %v1203
        %1315 = vmatpush.msra.mxu0 %v1202
        %1316 = vmatpush.msra.mxu0 %v1201
        %1317 = vmatpush.msra.mxu0 %v1200
        %1318 = vmatmul.f32.gmra.mxu0 %v1298
        %v1319 = vpop.f32.mrf.mxu0
        %v1320 = vadd.f32 0.0, %v1319
        %1321 = vmatmul.f32.gmra.mxu0 %v1300
        %v1322 = vpop.f32.mrf.mxu0
        %v1323 = vadd.f32 0.0, %v1322
        %1324 = vdwg.mxu0
        %v1325 = vsel %vm1216, %v1239, -inf
        %1326 = vmax.xlane.f32.xlu0 %v1325
        %v1327 = vpop.xlane.xlu0 %1326
        %v1328 = vsel %vm1216, %v1242, -inf
        %1329 = vmax.xlane.f32.xlu0 %v1328
        %v1330 = vpop.xlane.xlu0 %1329
        %v1331 = vsel %vm1216, %v1266, -inf
        %1332 = vmax.xlane.f32.xlu0 %v1331
        %v1333 = vpop.xlane.xlu0 %1332
        %v1334 = vsel %vm1216, %v1269, -inf
        %1335 = vmax.xlane.f32.xlu0 %v1334
        %v1336 = vpop.xlane.xlu0 %1335
        %v1337 = vsel %vm1216, %v1293, -inf
        %1338 = vmax.xlane.f32.xlu0 %v1337
        %v1339 = vpop.xlane.xlu0 %1338
        %v1340 = vsel %vm1216, %v1296, -inf
        %1341 = vmax.xlane.f32.xlu0 %v1340
        %v1342 = vpop.xlane.xlu0 %1341
        %v1343 = vsel %vm1216, %v1320, -inf
        %1344 = vmax.xlane.f32.xlu0 %v1343
        %v1345 = vpop.xlane.xlu0 %1344
        %v1346 = vsel %vm1216, %v1323, -inf
        %1347 = vmax.xlane.f32.xlu0 %v1346
        %v1348 = vpop.xlane.xlu0 %1347
        %v1349 = vsub.f32 %v1239, %v1327
        %v1350 = vsub.f32 %v1242, %v1330
        %v1351 = vsub.f32 %v1266, %v1333
        %v1352 = vsub.f32 %v1269, %v1336
        %v1353 = vsub.f32 %v1293, %v1339
        %v1354 = vsub.f32 %v1296, %v1342
        %v1355 = vsub.f32 %v1320, %v1345
        %v1356 = vsub.f32 %v1323, %v1348
        %v1357 = vmul.f32 %v1349, 1.442695
        %v1358 = vpow.pop %v1357
        %v1359 = vmul.f32 %v1350, 1.442695
        %v1360 = vpow.pop %v1359
        %v1361 = vmul.f32 %v1351, 1.442695
        %v1362 = vpow.pop %v1361
        %v1363 = vmul.f32 %v1352, 1.442695
        %v1364 = vpow.pop %v1363
        %v1365 = vmul.f32 %v1353, 1.442695
        %v1366 = vpow.pop %v1365
        %v1367 = vmul.f32 %v1354, 1.442695
        %v1368 = vpow.pop %v1367
        %v1369 = vmul.f32 %v1355, 1.442695
        %v1370 = vpow.pop %v1369
        %v1371 = vmul.f32 %v1356, 1.442695
        %v1372 = vpow.pop %v1371
        %v1373 = vsel %vm1216, %v1358, 0.0
        %1374 = vadd.xlane.f32.xlu0 %v1373
        %v1375 = vpop.xlane.xlu0 %1374
        %v1376 = vsel %vm1216, %v1360, 0.0
        %1377 = vadd.xlane.f32.xlu0 %v1376
        %v1378 = vpop.xlane.xlu0 %1377
        %v1379 = vsel %vm1216, %v1362, 0.0
        %1380 = vadd.xlane.f32.xlu0 %v1379
        %v1381 = vpop.xlane.xlu0 %1380
        %v1382 = vsel %vm1216, %v1364, 0.0
        %1383 = vadd.xlane.f32.xlu0 %v1382
        %v1384 = vpop.xlane.xlu0 %1383
        %v1385 = vsel %vm1216, %v1366, 0.0
        %1386 = vadd.xlane.f32.xlu0 %v1385
        %v1387 = vpop.xlane.xlu0 %1386
        %v1388 = vsel %vm1216, %v1368, 0.0
        %1389 = vadd.xlane.f32.xlu0 %v1388
        %v1390 = vpop.xlane.xlu0 %1389
        %v1391 = vsel %vm1216, %v1370, 0.0
        %1392 = vadd.xlane.f32.xlu0 %v1391
        %v1393 = vpop.xlane.xlu0 %1392
        %v1394 = vsel %vm1216, %v1372, 0.0
        %1395 = vadd.xlane.f32.xlu0 %v1394
        %v1396 = vpop.xlane.xlu0 %1395
        %v1397 = vrcp.pop %v1375
        %v1398 = vrcp.pop %v1378
        %v1399 = vrcp.pop %v1381
        %v1400 = vrcp.pop %v1384
        %v1401 = vrcp.pop %v1387
        %v1402 = vrcp.pop %v1390
        %v1403 = vrcp.pop %v1393
        %v1404 = vrcp.pop %v1396
        %v1405 = vmul.f32 %v1358, %v1397
        %v1406 = vmul.f32 %v1360, %v1398
        %v1407 = vmul.f32 %v1362, %v1399
        %v1408 = vmul.f32 %v1364, %v1400
        %v1409 = vmul.f32 %v1366, %v1401
        %v1410 = vmul.f32 %v1368, %v1402
        %v1411 = vmul.f32 %v1370, %v1403
        %v1412 = vmul.f32 %v1372, %v1404
        %1413 = vxpose.xlu0.b32.start [1/16] %v983, 128
        %1414 = vxpose.xlu0.b32.cont [2/16] %v986, 128
        %1415 = vxpose.xlu0.b32.cont [3/16] %v989, 128
        %1416 = vxpose.xlu0.b32.cont [4/16] %v992, 128
        %1417 = vxpose.xlu0.b32.cont [5/16] 0.0, 128
        %1418 = vxpose.xlu0.b32.cont [6/16] 0.0, 128
        %1419 = vxpose.xlu0.b32.cont [7/16] 0.0, 128
        %1420 = vxpose.xlu0.b32.cont [8/16] 0.0, 128
        %1421 = vxpose.xlu0.b32.cont [9/16] 0.0, 128
        %1422 = vxpose.xlu0.b32.cont [10/16] 0.0, 128
        %1423 = vxpose.xlu0.b32.cont [11/16] 0.0, 128
        %1424 = vxpose.xlu0.b32.cont [12/16] 0.0, 128
        %1425 = vxpose.xlu0.b32.cont [13/16] 0.0, 128
        %1426 = vxpose.xlu0.b32.cont [14/16] 0.0, 128
        %1427 = vxpose.xlu0.b32.cont [15/16] 0.0, 128
        %1428 = vxpose.xlu0.b32.end [16/16] 0.0, 128
        %v1429 = vpop.trf.xlu0
        %v1430 = vpop.trf.xlu0
        %v1431 = vpop.trf.xlu0
        %v1432 = vpop.trf.xlu0
        %v1433 = vpop.trf.xlu0
        %v1434 = vpop.trf.xlu0
        %v1435 = vpop.trf.xlu0
        %v1436 = vpop.trf.xlu0
        %v1437 = vpop.trf.xlu0
        %v1438 = vpop.trf.xlu0
        %v1439 = vpop.trf.xlu0
        %v1440 = vpop.trf.xlu0
        %v1441 = vpop.trf.xlu0
        %v1442 = vpop.trf.xlu0
        %v1443 = vpop.trf.xlu0
        %v1444 = vpop.trf.xlu0
        %1445 = vxpose.xlu0.b32.start [1/16] %v1053, 128
        %1446 = vxpose.xlu0.b32.cont [2/16] %v1055, 128
        %1447 = vxpose.xlu0.b32.cont [3/16] %v1057, 128
        %1448 = vxpose.xlu0.b32.cont [4/16] %v1059, 128
        %1449 = vxpose.xlu0.b32.cont [5/16] 0.0, 128
        %1450 = vxpose.xlu0.b32.cont [6/16] 0.0, 128
        %1451 = vxpose.xlu0.b32.cont [7/16] 0.0, 128
        %1452 = vxpose.xlu0.b32.cont [8/16] 0.0, 128
        %1453 = vxpose.xlu0.b32.cont [9/16] 0.0, 128
        %1454 = vxpose.xlu0.b32.cont [10/16] 0.0, 128
        %1455 = vxpose.xlu0.b32.cont [11/16] 0.0, 128
        %1456 = vxpose.xlu0.b32.cont [12/16] 0.0, 128
        %1457 = vxpose.xlu0.b32.cont [13/16] 0.0, 128
        %1458 = vxpose.xlu0.b32.cont [14/16] 0.0, 128
        %1459 = vxpose.xlu0.b32.cont [15/16] 0.0, 128
        %1460 = vxpose.xlu0.b32.end [16/16] 0.0, 128
        %v1461 = vpop.trf.xlu0
        %v1462 = vpop.trf.xlu0
        %v1463 = vpop.trf.xlu0
        %v1464 = vpop.trf.xlu0
        %v1465 = vpop.trf.xlu0
        %v1466 = vpop.trf.xlu0
        %v1467 = vpop.trf.xlu0
        %v1468 = vpop.trf.xlu0
        %v1469 = vpop.trf.xlu0
        %v1470 = vpop.trf.xlu0
        %v1471 = vpop.trf.xlu0
        %v1472 = vpop.trf.xlu0
        %v1473 = vpop.trf.xlu0
        %v1474 = vpop.trf.xlu0
        %v1475 = vpop.trf.xlu0
        %v1476 = vpop.trf.xlu0
        %1477 = vxpose.xlu0.b32.start [1/16] %v1065, 128
        %1478 = vxpose.xlu0.b32.cont [2/16] %v1067, 128
        %1479 = vxpose.xlu0.b32.cont [3/16] %v1069, 128
        %1480 = vxpose.xlu0.b32.cont [4/16] %v1071, 128
        %1481 = vxpose.xlu0.b32.cont [5/16] 0.0, 128
        %1482 = vxpose.xlu0.b32.cont [6/16] 0.0, 128
        %1483 = vxpose.xlu0.b32.cont [7/16] 0.0, 128
        %1484 = vxpose.xlu0.b32.cont [8/16] 0.0, 128
        %1485 = vxpose.xlu0.b32.cont [9/16] 0.0, 128
        %1486 = vxpose.xlu0.b32.cont [10/16] 0.0, 128
        %1487 = vxpose.xlu0.b32.cont [11/16] 0.0, 128
        %1488 = vxpose.xlu0.b32.cont [12/16] 0.0, 128
        %1489 = vxpose.xlu0.b32.cont [13/16] 0.0, 128
        %1490 = vxpose.xlu0.b32.cont [14/16] 0.0, 128
        %1491 = vxpose.xlu0.b32.cont [15/16] 0.0, 128
        %1492 = vxpose.xlu0.b32.end [16/16] 0.0, 128
        %v1493 = vpop.trf.xlu0
        %v1494 = vpop.trf.xlu0
        %v1495 = vpop.trf.xlu0
        %v1496 = vpop.trf.xlu0
        %v1497 = vpop.trf.xlu0
        %v1498 = vpop.trf.xlu0
        %v1499 = vpop.trf.xlu0
        %v1500 = vpop.trf.xlu0
        %v1501 = vpop.trf.xlu0
        %v1502 = vpop.trf.xlu0
        %v1503 = vpop.trf.xlu0
        %v1504 = vpop.trf.xlu0
        %v1505 = vpop.trf.xlu0
        %v1506 = vpop.trf.xlu0
        %v1507 = vpop.trf.xlu0
        %v1508 = vpop.trf.xlu0
        %1509 = vxpose.xlu0.b32.start [1/16] %v1077, 128
        %1510 = vxpose.xlu0.b32.cont [2/16] %v1079, 128
        %1511 = vxpose.xlu0.b32.cont [3/16] %v1081, 128
        %1512 = vxpose.xlu0.b32.cont [4/16] %v1083, 128
        %1513 = vxpose.xlu0.b32.cont [5/16] 0.0, 128
        %1514 = vxpose.xlu0.b32.cont [6/16] 0.0, 128
        %1515 = vxpose.xlu0.b32.cont [7/16] 0.0, 128
        %1516 = vxpose.xlu0.b32.cont [8/16] 0.0, 128
        %1517 = vxpose.xlu0.b32.cont [9/16] 0.0, 128
        %1518 = vxpose.xlu0.b32.cont [10/16] 0.0, 128
        %1519 = vxpose.xlu0.b32.cont [11/16] 0.0, 128
        %1520 = vxpose.xlu0.b32.cont [12/16] 0.0, 128
        %1521 = vxpose.xlu0.b32.cont [13/16] 0.0, 128
        %1522 = vxpose.xlu0.b32.cont [14/16] 0.0, 128
        %1523 = vxpose.xlu0.b32.cont [15/16] 0.0, 128
        %1524 = vxpose.xlu0.b32.end [16/16] 0.0, 128
        %v1525 = vpop.trf.xlu0
        %v1526 = vpop.trf.xlu0
        %v1527 = vpop.trf.xlu0
        %v1528 = vpop.trf.xlu0
        %v1529 = vpop.trf.xlu0
        %v1530 = vpop.trf.xlu0
        %v1531 = vpop.trf.xlu0
        %v1532 = vpop.trf.xlu0
        %v1533 = vpop.trf.xlu0
        %v1534 = vpop.trf.xlu0
        %v1535 = vpop.trf.xlu0
        %v1536 = vpop.trf.xlu0
        %v1537 = vpop.trf.xlu0
        %v1538 = vpop.trf.xlu0
        %v1539 = vpop.trf.xlu0
        %v1540 = vpop.trf.xlu0
        %v1542 = vsel %vm1216, %v1429, 0
        %v1545 = vsel %vm1216, %v1430, 0
        %v1548 = vsel %vm1216, %v1431, 0
        %v1551 = vsel %vm1216, %v1432, 0
        %v1554 = vsel %vm1216, %v1405, 0
        %v1557 = vsel %vm1216, %v1406, 0
        %1559 = vmatpush.xpose.msra.mxu0 0.0
        %1560 = vmatpush.xpose.msra.mxu0 0.0
        %1561 = vmatpush.xpose.msra.mxu0 0.0
        %1562 = vmatpush.xpose.msra.mxu0 0.0
        %1563 = vmatpush.xpose.msra.mxu0 0.0
        %1564 = vmatpush.xpose.msra.mxu0 0.0
        %1565 = vmatpush.xpose.msra.mxu0 0.0
        %1566 = vmatpush.xpose.msra.mxu0 0.0
        %1567 = vmatpush.xpose.msra.mxu0 0.0
        %1568 = vmatpush.xpose.msra.mxu0 0.0
        %1569 = vmatpush.xpose.msra.mxu0 0.0
        %1570 = vmatpush.xpose.msra.mxu0 0.0
        %1571 = vmatpush.xpose.msra.mxu0 0.0
        %1572 = vmatpush.xpose.msra.mxu0 0.0
        %1573 = vmatpush.xpose.msra.mxu0 %v1557
        %1574 = vmatpush.xpose.msra.mxu0 %v1554
        %1575 = vmatmul.f32.gmra.mxu0 %v1542
        %v1576 = vpop.f32.mrf.mxu0
        %v1577 = vadd.f32 0.0, %v1576
        %1578 = vmatmul.f32.gmra.mxu0 %v1545
        %v1579 = vpop.f32.mrf.mxu0
        %v1580 = vadd.f32 0.0, %v1579
        %1581 = vmatmul.f32.gmra.mxu0 %v1548
        %v1582 = vpop.f32.mrf.mxu0
        %v1583 = vadd.f32 0.0, %v1582
        %1584 = vmatmul.f32.gmra.mxu0 %v1551
        %v1585 = vpop.f32.mrf.mxu0
        %v1586 = vadd.f32 0.0, %v1585
        %1587 = vdwg.mxu0
        %v1589 = vsel %vm1216, %v1461, 0
        %v1592 = vsel %vm1216, %v1462, 0
        %v1595 = vsel %vm1216, %v1463, 0
        %v1598 = vsel %vm1216, %v1464, 0
        %v1601 = vsel %vm1216, %v1407, 0
        %v1604 = vsel %vm1216, %v1408, 0
        %1606 = vmatpush.xpose.msra.mxu0 0.0
        %1607 = vmatpush.xpose.msra.mxu0 0.0
        %1608 = vmatpush.xpose.msra.mxu0 0.0
        %1609 = vmatpush.xpose.msra.mxu0 0.0
        %1610 = vmatpush.xpose.msra.mxu0 0.0
        %1611 = vmatpush.xpose.msra.mxu0 0.0
        %1612 = vmatpush.xpose.msra.mxu0 0.0
        %1613 = vmatpush.xpose.msra.mxu0 0.0
        %1614 = vmatpush.xpose.msra.mxu0 0.0
        %1615 = vmatpush.xpose.msra.mxu0 0.0
        %1616 = vmatpush.xpose.msra.mxu0 0.0
        %1617 = vmatpush.xpose.msra.mxu0 0.0
        %1618 = vmatpush.xpose.msra.mxu0 0.0
        %1619 = vmatpush.xpose.msra.mxu0 0.0
        %1620 = vmatpush.xpose.msra.mxu0 %v1604
        %1621 = vmatpush.xpose.msra.mxu0 %v1601
        %1622 = vmatmul.f32.gmra.mxu0 %v1589
        %v1623 = vpop.f32.mrf.mxu0
        %v1624 = vadd.f32 0.0, %v1623
        %1625 = vmatmul.f32.gmra.mxu0 %v1592
        %v1626 = vpop.f32.mrf.mxu0
        %v1627 = vadd.f32 0.0, %v1626
        %1628 = vmatmul.f32.gmra.mxu0 %v1595
        %v1629 = vpop.f32.mrf.mxu0
        %v1630 = vadd.f32 0.0, %v1629
        %1631 = vmatmul.f32.gmra.mxu0 %v1598
        %v1632 = vpop.f32.mrf.mxu0
        %v1633 = vadd.f32 0.0, %v1632
        %1634 = vdwg.mxu0
        %v1636 = vsel %vm1216, %v1493, 0
        %v1639 = vsel %vm1216, %v1494, 0
        %v1642 = vsel %vm1216, %v1495, 0
        %v1645 = vsel %vm1216, %v1496, 0
        %v1648 = vsel %vm1216, %v1409, 0
        %v1651 = vsel %vm1216, %v1410, 0
        %1653 = vmatpush.xpose.msra.mxu0 0.0
        %1654 = vmatpush.xpose.msra.mxu0 0.0
        %1655 = vmatpush.xpose.msra.mxu0 0.0
        %1656 = vmatpush.xpose.msra.mxu0 0.0
        %1657 = vmatpush.xpose.msra.mxu0 0.0
        %1658 = vmatpush.xpose.msra.mxu0 0.0
        %1659 = vmatpush.xpose.msra.mxu0 0.0
        %1660 = vmatpush.xpose.msra.mxu0 0.0
        %1661 = vmatpush.xpose.msra.mxu0 0.0
        %1662 = vmatpush.xpose.msra.mxu0 0.0
        %1663 = vmatpush.xpose.msra.mxu0 0.0
        %1664 = vmatpush.xpose.msra.mxu0 0.0
        %1665 = vmatpush.xpose.msra.mxu0 0.0
        %1666 = vmatpush.xpose.msra.mxu0 0.0
        %1667 = vmatpush.xpose.msra.mxu0 %v1651
        %1668 = vmatpush.xpose.msra.mxu0 %v1648
        %1669 = vmatmul.f32.gmra.mxu0 %v1636
        %v1670 = vpop.f32.mrf.mxu0
        %v1671 = vadd.f32 0.0, %v1670
        %1672 = vmatmul.f32.gmra.mxu0 %v1639
        %v1673 = vpop.f32.mrf.mxu0
        %v1674 = vadd.f32 0.0, %v1673
        %1675 = vmatmul.f32.gmra.mxu0 %v1642
        %v1676 = vpop.f32.mrf.mxu0
        %v1677 = vadd.f32 0.0, %v1676
        %1678 = vmatmul.f32.gmra.mxu0 %v1645
        %v1679 = vpop.f32.mrf.mxu0
        %v1680 = vadd.f32 0.0, %v1679
        %1681 = vdwg.mxu0
        %v1683 = vsel %vm1216, %v1525, 0
        %v1686 = vsel %vm1216, %v1526, 0
        %v1689 = vsel %vm1216, %v1527, 0
        %v1692 = vsel %vm1216, %v1528, 0
        %v1695 = vsel %vm1216, %v1411, 0
        %v1698 = vsel %vm1216, %v1412, 0
        %1700 = vmatpush.xpose.msra.mxu0 0.0
        %1701 = vmatpush.xpose.msra.mxu0 0.0
        %1702 = vmatpush.xpose.msra.mxu0 0.0
        %1703 = vmatpush.xpose.msra.mxu0 0.0
        %1704 = vmatpush.xpose.msra.mxu0 0.0
        %1705 = vmatpush.xpose.msra.mxu0 0.0
        %1706 = vmatpush.xpose.msra.mxu0 0.0
        %1707 = vmatpush.xpose.msra.mxu0 0.0
        %1708 = vmatpush.xpose.msra.mxu0 0.0
        %1709 = vmatpush.xpose.msra.mxu0 0.0
        %1710 = vmatpush.xpose.msra.mxu0 0.0
        %1711 = vmatpush.xpose.msra.mxu0 0.0
        %1712 = vmatpush.xpose.msra.mxu0 0.0
        %1713 = vmatpush.xpose.msra.mxu0 0.0
        %1714 = vmatpush.xpose.msra.mxu0 %v1698
        %1715 = vmatpush.xpose.msra.mxu0 %v1695
        %1716 = vmatmul.f32.gmra.mxu0 %v1683
        %v1717 = vpop.f32.mrf.mxu0
        %v1718 = vadd.f32 0.0, %v1717
        %1719 = vmatmul.f32.gmra.mxu0 %v1686
        %v1720 = vpop.f32.mrf.mxu0
        %v1721 = vadd.f32 0.0, %v1720
        %1722 = vmatmul.f32.gmra.mxu0 %v1689
        %v1723 = vpop.f32.mrf.mxu0
        %v1724 = vadd.f32 0.0, %v1723
        %1725 = vmatmul.f32.gmra.mxu0 %v1692
        %v1726 = vpop.f32.mrf.mxu0
        %v1727 = vadd.f32 0.0, %v1726
        %1728 = vdwg.mxu0
        %1729 = vxpose.xlu0.b32.start [1/16] %v1577, 128
        %1730 = vxpose.xlu0.b32.cont [2/16] %v1580, 128
        %1731 = vxpose.xlu0.b32.cont [3/16] %v1583, 128
        %1732 = vxpose.xlu0.b32.cont [4/16] %v1586, 128
        %1733 = vxpose.xlu0.b32.cont [5/16] 0.0, 128
        %1734 = vxpose.xlu0.b32.cont [6/16] 0.0, 128
        %1735 = vxpose.xlu0.b32.cont [7/16] 0.0, 128
        %1736 = vxpose.xlu0.b32.cont [8/16] 0.0, 128
        %1737 = vxpose.xlu0.b32.cont [9/16] 0.0, 128
        %1738 = vxpose.xlu0.b32.cont [10/16] 0.0, 128
        %1739 = vxpose.xlu0.b32.cont [11/16] 0.0, 128
        %1740 = vxpose.xlu0.b32.cont [12/16] 0.0, 128
        %1741 = vxpose.xlu0.b32.cont [13/16] 0.0, 128
        %1742 = vxpose.xlu0.b32.cont [14/16] 0.0, 128
        %1743 = vxpose.xlu0.b32.cont [15/16] 0.0, 128
        %1744 = vxpose.xlu0.b32.end [16/16] 0.0, 128
        %v1745 = vpop.trf.xlu0
        %v1746 = vpop.trf.xlu0
        %v1747 = vpop.trf.xlu0
        %v1748 = vpop.trf.xlu0
        %v1749 = vpop.trf.xlu0
        %v1750 = vpop.trf.xlu0
        %v1751 = vpop.trf.xlu0
        %v1752 = vpop.trf.xlu0
        %v1753 = vpop.trf.xlu0
        %v1754 = vpop.trf.xlu0
        %v1755 = vpop.trf.xlu0
        %v1756 = vpop.trf.xlu0
        %v1757 = vpop.trf.xlu0
        %v1758 = vpop.trf.xlu0
        %v1759 = vpop.trf.xlu0
        %v1760 = vpop.trf.xlu0
        %1761 = vxpose.xlu0.b32.start [1/16] %v1624, 128
        %1762 = vxpose.xlu0.b32.cont [2/16] %v1627, 128
        %1763 = vxpose.xlu0.b32.cont [3/16] %v1630, 128
        %1764 = vxpose.xlu0.b32.cont [4/16] %v1633, 128
        %1765 = vxpose.xlu0.b32.cont [5/16] 0.0, 128
        %1766 = vxpose.xlu0.b32.cont [6/16] 0.0, 128
        %1767 = vxpose.xlu0.b32.cont [7/16] 0.0, 128
        %1768 = vxpose.xlu0.b32.cont [8/16] 0.0, 128
        %1769 = vxpose.xlu0.b32.cont [9/16] 0.0, 128
        %1770 = vxpose.xlu0.b32.cont [10/16] 0.0, 128
        %1771 = vxpose.xlu0.b32.cont [11/16] 0.0, 128
        %1772 = vxpose.xlu0.b32.cont [12/16] 0.0, 128
        %1773 = vxpose.xlu0.b32.cont [13/16] 0.0, 128
        %1774 = vxpose.xlu0.b32.cont [14/16] 0.0, 128
        %1775 = vxpose.xlu0.b32.cont [15/16] 0.0, 128
        %1776 = vxpose.xlu0.b32.end [16/16] 0.0, 128
        %v1777 = vpop.trf.xlu0
        %v1778 = vpop.trf.xlu0
        %v1779 = vpop.trf.xlu0
        %v1780 = vpop.trf.xlu0
        %v1781 = vpop.trf.xlu0
        %v1782 = vpop.trf.xlu0
        %v1783 = vpop.trf.xlu0
        %v1784 = vpop.trf.xlu0
        %v1785 = vpop.trf.xlu0
        %v1786 = vpop.trf.xlu0
        %v1787 = vpop.trf.xlu0
        %v1788 = vpop.trf.xlu0
        %v1789 = vpop.trf.xlu0
        %v1790 = vpop.trf.xlu0
        %v1791 = vpop.trf.xlu0
        %v1792 = vpop.trf.xlu0
        %1793 = vxpose.xlu0.b32.start [1/16] %v1671, 128
        %1794 = vxpose.xlu0.b32.cont [2/16] %v1674, 128
        %1795 = vxpose.xlu0.b32.cont [3/16] %v1677, 128
        %1796 = vxpose.xlu0.b32.cont [4/16] %v1680, 128
        %1797 = vxpose.xlu0.b32.cont [5/16] 0.0, 128
        %1798 = vxpose.xlu0.b32.cont [6/16] 0.0, 128
        %1799 = vxpose.xlu0.b32.cont [7/16] 0.0, 128
        %1800 = vxpose.xlu0.b32.cont [8/16] 0.0, 128
        %1801 = vxpose.xlu0.b32.cont [9/16] 0.0, 128
        %1802 = vxpose.xlu0.b32.cont [10/16] 0.0, 128
        %1803 = vxpose.xlu0.b32.cont [11/16] 0.0, 128
        %1804 = vxpose.xlu0.b32.cont [12/16] 0.0, 128
        %1805 = vxpose.xlu0.b32.cont [13/16] 0.0, 128
        %1806 = vxpose.xlu0.b32.cont [14/16] 0.0, 128
        %1807 = vxpose.xlu0.b32.cont [15/16] 0.0, 128
        %1808 = vxpose.xlu0.b32.end [16/16] 0.0, 128
        %v1809 = vpop.trf.xlu0
        %v1810 = vpop.trf.xlu0
        %v1811 = vpop.trf.xlu0
        %v1812 = vpop.trf.xlu0
        %v1813 = vpop.trf.xlu0
        %v1814 = vpop.trf.xlu0
        %v1815 = vpop.trf.xlu0
        %v1816 = vpop.trf.xlu0
        %v1817 = vpop.trf.xlu0
        %v1818 = vpop.trf.xlu0
        %v1819 = vpop.trf.xlu0
        %v1820 = vpop.trf.xlu0
        %v1821 = vpop.trf.xlu0
        %v1822 = vpop.trf.xlu0
        %v1823 = vpop.trf.xlu0
        %v1824 = vpop.trf.xlu0
        %1825 = vxpose.xlu0.b32.start [1/16] %v1718, 128
        %1826 = vxpose.xlu0.b32.cont [2/16] %v1721, 128
        %1827 = vxpose.xlu0.b32.cont [3/16] %v1724, 128
        %1828 = vxpose.xlu0.b32.cont [4/16] %v1727, 128
        %1829 = vxpose.xlu0.b32.cont [5/16] 0.0, 128
        %1830 = vxpose.xlu0.b32.cont [6/16] 0.0, 128
        %1831 = vxpose.xlu0.b32.cont [7/16] 0.0, 128
        %1832 = vxpose.xlu0.b32.cont [8/16] 0.0, 128
        %1833 = vxpose.xlu0.b32.cont [9/16] 0.0, 128
        %1834 = vxpose.xlu0.b32.cont [10/16] 0.0, 128
        %1835 = vxpose.xlu0.b32.cont [11/16] 0.0, 128
        %1836 = vxpose.xlu0.b32.cont [12/16] 0.0, 128
        %1837 = vxpose.xlu0.b32.cont [13/16] 0.0, 128
        %1838 = vxpose.xlu0.b32.cont [14/16] 0.0, 128
        %1839 = vxpose.xlu0.b32.cont [15/16] 0.0, 128
        %1840 = vxpose.xlu0.b32.end [16/16] 0.0, 128
        %v1841 = vpop.trf.xlu0
        %v1842 = vpop.trf.xlu0
        %v1843 = vpop.trf.xlu0
        %v1844 = vpop.trf.xlu0
        %v1845 = vpop.trf.xlu0
        %v1846 = vpop.trf.xlu0
        %v1847 = vpop.trf.xlu0
        %v1848 = vpop.trf.xlu0
        %v1849 = vpop.trf.xlu0
        %v1850 = vpop.trf.xlu0
        %v1851 = vpop.trf.xlu0
        %v1852 = vpop.trf.xlu0
        %v1853 = vpop.trf.xlu0
        %v1854 = vpop.trf.xlu0
        %v1855 = vpop.trf.xlu0
        %v1856 = vpop.trf.xlu0
        %v1857 = vrot.slane %v1809, 4
        %vm1858 = vcmask 1047556
        %v1859 = vsel %vm1858, %v1857, %v1745
        %v1860 = vrot.slane %v1745, 4
        %v1861 = vsel %vm1858, %v1809, %v1860
        %v1863 = vunpack.c.l.s4 1983009808
        %v1864 = vunpack.c.0.s8 %v1863
        %v1865 = vperm.slane %v1859, %v1864
        %v1867 = vunpack.c.l.s4 1983009808
        %v1868 = vunpack.c.0.s8 %v1867
        %v1869 = vperm.slane %v1861, %v1868
        %v1870 = vrot.slane %v1841, 4
        %v1871 = vsel %vm1858, %v1870, %v1777
        %v1872 = vrot.slane %v1777, 4
        %v1873 = vsel %vm1858, %v1841, %v1872
        %v1875 = vunpack.c.l.s4 1983009808
        %v1876 = vunpack.c.0.s8 %v1875
        %v1877 = vperm.slane %v1871, %v1876
        %v1879 = vunpack.c.l.s4 1983009808
        %v1880 = vunpack.c.0.s8 %v1879
        %v1881 = vperm.slane %v1873, %v1880
        %v1882 = vrot.slane %v1877, 4
        %v1883 = vsel %vm1858, %v1882, %v1865
        %v1884 = vrot.slane %v1865, 4
        %v1885 = vsel %vm1858, %v1877, %v1884
        %v1887 = vunpack.c.l.s4 1934713408
        %v1888 = vunpack.c.0.s8 %v1887
        %v1889 = vperm.slane %v1883, %v1888
        %v1891 = vunpack.c.l.s4 1934713408
        %v1892 = vunpack.c.0.s8 %v1891
        %v1893 = vperm.slane %v1885, %v1892
        %v1894 = vrot.slane %v1881, 4
        %v1895 = vsel %vm1858, %v1894, %v1869
        %v1896 = vrot.slane %v1869, 4
        %v1897 = vsel %vm1858, %v1881, %v1896
        %v1899 = vunpack.c.l.s4 1934713408
        %v1900 = vunpack.c.0.s8 %v1899
        %v1901 = vperm.slane %v1895, %v1900
        %v1903 = vunpack.c.l.s4 1934713408
        %v1904 = vunpack.c.0.s8 %v1903
        %v1905 = vperm.slane %v1897, %v1904
        %v1906 = vrot.slane %v1889, 4
        %v1907 = vsel %vm1858, 0.0, %v1906
        %v1908 = vrot.slane %v1893, 4
        %v1909 = vsel %vm1858, 0.0, %v1908
        %v1910 = vrot.slane %v1901, 4
        %v1911 = vsel %vm1858, 0.0, %v1910
        %v1912 = vrot.slane %v1905, 4
        %v1913 = vsel %vm1858, 0.0, %v1912
        %v1914 = vrot.slane %v1810, 4
        %v1915 = vsel %vm1858, %v1914, %v1746
        %v1916 = vrot.slane %v1746, 4
        %v1917 = vsel %vm1858, %v1810, %v1916
        %v1919 = vunpack.c.l.s4 1983009808
        %v1920 = vunpack.c.0.s8 %v1919
        %v1921 = vperm.slane %v1915, %v1920
        %v1923 = vunpack.c.l.s4 1983009808
        %v1924 = vunpack.c.0.s8 %v1923
        %v1925 = vperm.slane %v1917, %v1924
        %v1926 = vrot.slane %v1842, 4
        %v1927 = vsel %vm1858, %v1926, %v1778
        %v1928 = vrot.slane %v1778, 4
        %v1929 = vsel %vm1858, %v1842, %v1928
        %v1931 = vunpack.c.l.s4 1983009808
        %v1932 = vunpack.c.0.s8 %v1931
        %v1933 = vperm.slane %v1927, %v1932
        %v1935 = vunpack.c.l.s4 1983009808
        %v1936 = vunpack.c.0.s8 %v1935
        %v1937 = vperm.slane %v1929, %v1936
        %v1938 = vrot.slane %v1933, 4
        %v1939 = vsel %vm1858, %v1938, %v1921
        %v1940 = vrot.slane %v1921, 4
        %v1941 = vsel %vm1858, %v1933, %v1940
        %v1943 = vunpack.c.l.s4 1934713408
        %v1944 = vunpack.c.0.s8 %v1943
        %v1945 = vperm.slane %v1939, %v1944
        %v1947 = vunpack.c.l.s4 1934713408
        %v1948 = vunpack.c.0.s8 %v1947
        %v1949 = vperm.slane %v1941, %v1948
        %v1950 = vrot.slane %v1937, 4
        %v1951 = vsel %vm1858, %v1950, %v1925
        %v1952 = vrot.slane %v1925, 4
        %v1953 = vsel %vm1858, %v1937, %v1952
        %v1955 = vunpack.c.l.s4 1934713408
        %v1956 = vunpack.c.0.s8 %v1955
        %v1957 = vperm.slane %v1951, %v1956
        %v1959 = vunpack.c.l.s4 1934713408
        %v1960 = vunpack.c.0.s8 %v1959
        %v1961 = vperm.slane %v1953, %v1960
        %v1962 = vrot.slane %v1945, 4
        %v1963 = vsel %vm1858, 0.0, %v1962
        %v1964 = vrot.slane %v1949, 4
        %v1965 = vsel %vm1858, 0.0, %v1964
        %v1966 = vrot.slane %v1957, 4
        %v1967 = vsel %vm1858, 0.0, %v1966
        %v1968 = vrot.slane %v1961, 4
        %v1969 = vsel %vm1858, 0.0, %v1968
        %v1970 = vsel %vm1858, %v1908, %v1889
        %v1972 = vunpack.c.l.s4 1983009808
        %v1973 = vunpack.c.0.s8 %v1972
        %v1974 = vperm.slane %v1970, %v1973
        %v1975 = vrot.slane %v1909, 4
        %v1976 = vsel %vm1858, %v1975, %v1907
        %v1978 = vunpack.c.l.s4 1983009808
        %v1979 = vunpack.c.0.s8 %v1978
        %v1980 = vperm.slane %v1976, %v1979
        %v1981 = vsel %vm1858, %v1912, %v1901
        %v1983 = vunpack.c.l.s4 1983009808
        %v1984 = vunpack.c.0.s8 %v1983
        %v1985 = vperm.slane %v1981, %v1984
        %v1986 = vrot.slane %v1913, 4
        %v1987 = vsel %vm1858, %v1986, %v1911
        %v1989 = vunpack.c.l.s4 1983009808
        %v1990 = vunpack.c.0.s8 %v1989
        %v1991 = vperm.slane %v1987, %v1990
        %v1992 = vrot.slane %v1980, 4
        %v1993 = vsel %vm1858, %v1992, %v1974
        %v1994 = vrot.slane %v1974, 4
        %v1995 = vsel %vm1858, %v1980, %v1994
        %v1997 = vunpack.c.l.s4 1934713408
        %v1998 = vunpack.c.0.s8 %v1997
        %v1999 = vperm.slane %v1993, %v1998
        %v2001 = vunpack.c.l.s4 1934713408
        %v2002 = vunpack.c.0.s8 %v2001
        %v2003 = vperm.slane %v1995, %v2002
        %v2004 = vrot.slane %v1991, 4
        %v2005 = vsel %vm1858, %v2004, %v1985
        %v2006 = vrot.slane %v1985, 4
        %v2007 = vsel %vm1858, %v1991, %v2006
        %v2009 = vunpack.c.l.s4 1934713408
        %v2010 = vunpack.c.0.s8 %v2009
        %v2011 = vperm.slane %v2005, %v2010
        %v2013 = vunpack.c.l.s4 1934713408
        %v2014 = vunpack.c.0.s8 %v2013
        %v2015 = vperm.slane %v2007, %v2014
        %v2016 = vrot.slane %v2011, 4
        %v2017 = vsel %vm1858, %v2016, %v1999
        %v2018 = vrot.slane %v1999, 4
        %v2019 = vsel %vm1858, %v2011, %v2018
        %v2020 = vrot.slane %v2015, 4
        %v2021 = vsel %vm1858, %v2020, %v2003
        %v2022 = vrot.slane %v2003, 4
        %v2023 = vsel %vm1858, %v2015, %v2022
        %v2024 = vsel %vm1858, %v1964, %v1945
        %v2026 = vunpack.c.l.s4 1983009808
        %v2027 = vunpack.c.0.s8 %v2026
        %v2028 = vperm.slane %v2024, %v2027
        %v2029 = vrot.slane %v1965, 4
        %v2030 = vsel %vm1858, %v2029, %v1963
        %v2032 = vunpack.c.l.s4 1983009808
        %v2033 = vunpack.c.0.s8 %v2032
        %v2034 = vperm.slane %v2030, %v2033
        %v2035 = vsel %vm1858, %v1968, %v1957
        %v2037 = vunpack.c.l.s4 1983009808
        %v2038 = vunpack.c.0.s8 %v2037
        %v2039 = vperm.slane %v2035, %v2038
        %v2040 = vrot.slane %v1969, 4
        %v2041 = vsel %vm1858, %v2040, %v1967
        %v2043 = vunpack.c.l.s4 1983009808
        %v2044 = vunpack.c.0.s8 %v2043
        %v2045 = vperm.slane %v2041, %v2044
        %v2046 = vrot.slane %v2034, 4
        %v2047 = vsel %vm1858, %v2046, %v2028
        %v2048 = vrot.slane %v2028, 4
        %v2049 = vsel %vm1858, %v2034, %v2048
        %v2051 = vunpack.c.l.s4 1934713408
        %v2052 = vunpack.c.0.s8 %v2051
        %v2053 = vperm.slane %v2047, %v2052
        %v2055 = vunpack.c.l.s4 1934713408
        %v2056 = vunpack.c.0.s8 %v2055
        %v2057 = vperm.slane %v2049, %v2056
        %v2058 = vrot.slane %v2045, 4
        %v2059 = vsel %vm1858, %v2058, %v2039
        %v2060 = vrot.slane %v2039, 4
        %v2061 = vsel %vm1858, %v2045, %v2060
        %v2063 = vunpack.c.l.s4 1934713408
        %v2064 = vunpack.c.0.s8 %v2063
        %v2065 = vperm.slane %v2059, %v2064
        %v2067 = vunpack.c.l.s4 1934713408
        %v2068 = vunpack.c.0.s8 %v2067
        %v2069 = vperm.slane %v2061, %v2068
        %v2070 = vrot.slane %v2065, 4
        %v2071 = vsel %vm1858, %v2070, %v2053
        %v2072 = vrot.slane %v2053, 4
        %v2073 = vsel %vm1858, %v2065, %v2072
        %v2074 = vrot.slane %v2069, 4
        %v2075 = vsel %vm1858, %v2074, %v2057
        %v2076 = vrot.slane %v2057, 4
        %v2077 = vsel %vm1858, %v2069, %v2076
        %2080 = vrot.lane.b32.xlu0 %v2019, 32
        %v2081 = vpop.permute.xlu0 %2080
        %2082 = vrot.lane.b32.xlu0 %v2073, 32
        %v2083 = vpop.permute.xlu0 %2082
        %2088 = vrot.lane.b32.xlu0 %v2021, 64
        %v2089 = vpop.permute.xlu0 %2088
        %2090 = vrot.lane.b32.xlu0 %v2075, 64
        %v2091 = vpop.permute.xlu0 %2090
        %2096 = vrot.lane.b32.xlu0 %v2023, 96
        %v2097 = vpop.permute.xlu0 %2096
        %2098 = vrot.lane.b32.xlu0 %v2077, 96
        %v2099 = vpop.permute.xlu0 %2098
        %v2102 = vsel %vm1216, %v2017, %v2081
        %v2103 = vsel %vm1216, %v2071, %v2083
        %vm2104 = vcmask 523264
        %v2105 = vsel %vm2104, %v2102, %v2089
        %v2106 = vsel %vm2104, %v2103, %v2091
        %vm2107 = vcmask 785408
        %v2108 = vsel %vm2107, %v2105, %v2097
        %v2109 = vsel %vm2107, %v2106, %v2099
        %v2110 = vld [vmem:[#allocation10] sm:$0xff]
        %v2111 = vld [vmem:[#allocation10 + $0x8] sm:$0xff]
        %v2112 = vld [vmem:[#allocation10 + $0x10] sm:$0xff]
        %v2113 = vld [vmem:[#allocation10 + $0x18] sm:$0xff]
        %v2114 = vld [vmem:[#allocation10 + $0x20] sm:$0xff]
        %v2115 = vld [vmem:[#allocation10 + $0x28] sm:$0xff]
        %v2116 = vld [vmem:[#allocation10 + $0x30] sm:$0xff]
        %v2117 = vld [vmem:[#allocation10 + $0x38] sm:$0xff]
        %v2118 = vld [vmem:[#allocation10 + $0x40] sm:$0xff]
        %v2119 = vld [vmem:[#allocation10 + $0x48] sm:$0xff]
        %v2120 = vld [vmem:[#allocation10 + $0x50] sm:$0xff]
        %v2121 = vld [vmem:[#allocation10 + $0x58] sm:$0xff]
        %v2122 = vld [vmem:[#allocation10 + $0x60] sm:$0xff]
        %v2123 = vld [vmem:[#allocation10 + $0x68] sm:$0xff]
        %v2124 = vld [vmem:[#allocation10 + $0x70] sm:$0xff]
        %v2125 = vld [vmem:[#allocation10 + $0x78] sm:$0xff]
        %v2126 = vld [vmem:[%s11] sm:$0x1]
        %v2128 = vperm.slane %v2126, 0
        %2130 = vmatpush.msra.mxu0 %v2125
        %2131 = vmatpush.msra.mxu0 %v2124
        %2132 = vmatpush.msra.mxu0 %v2123
        %2133 = vmatpush.msra.mxu0 %v2122
        %2134 = vmatpush.msra.mxu0 %v2121
        %2135 = vmatpush.msra.mxu0 %v2120
        %2136 = vmatpush.msra.mxu0 %v2119
        %2137 = vmatpush.msra.mxu0 %v2118
        %2138 = vmatpush.msra.mxu0 %v2117
        %2139 = vmatpush.msra.mxu0 %v2116
        %2140 = vmatpush.msra.mxu0 %v2115
        %2141 = vmatpush.msra.mxu0 %v2114
        %2142 = vmatpush.msra.mxu0 %v2113
        %2143 = vmatpush.msra.mxu0 %v2112
        %2144 = vmatpush.msra.mxu0 %v2111
        %2145 = vmatpush.msra.mxu0 %v2110
        %2146 = vmatmul.f32.gmra.mxu0 %v2108
        %v2147 = vpop.f32.mrf.mxu0
        %v2148 = vadd.f32 %v2128, %v2147
        %2149 = vmatmul.f32.gmra.mxu0 %v2109
        %v2150 = vpop.f32.mrf.mxu0
        %v2151 = vadd.f32 %v2128, %v2150
        %2152 = vdwg.mxu0
        %v2153 = vsel %vm1216, %v1405, 0.0
        %v2154 = vsel %vm1216, %v1407, 0.0
        %v2155 = vadd.f32 %v2153, %v2154
        %v2156 = vsel %vm1216, %v1409, 0.0
        %v2157 = vadd.f32 %v2155, %v2156
        %v2158 = vsel %vm1216, %v1411, 0.0
        %v2159 = vadd.f32 %v2157, %v2158
        %v2160 = vsel %vm1216, %v1406, 0.0
        %v2161 = vsel %vm1216, %v1408, 0.0
        %v2162 = vadd.f32 %v2160, %v2161
        %v2163 = vsel %vm1216, %v1410, 0.0
        %v2164 = vadd.f32 %v2162, %v2163
        %v2165 = vsel %vm1216, %v1412, 0.0
        %v2166 = vadd.f32 %v2164, %v2165
        %v2167 = vrcp.pop 4.0
        %v2168 = vmul.f32 4.0, %v2167
        %v2169 = vsub.f32 1.0, %v2168
        %v2170 = vmul.f32 %v2167, %v2169
        %v2171 = vadd.f32 %v2167, %v2170
        %vm2172 = vweird.f32 %v2167
        %v2173 = vsel %vm2172, %v2167, %v2171
        %v2174 = vmul.f32 %v2159, %v2173
        %v2175 = vmul.f32 %v2166, %v2173
        %v2176 = vsel %vm1216, %v2174, 0.0
        %v2177 = vsel %vm1216, %v2175, 0.0
        %2178 = vst [vmem:[%s831] sm:$0xff] %v2176
        %2179 = vst [vmem:[%s831 + $0x8] sm:$0xff] %v2177
        %v2180 = vld [vmem:[%s841] sm:$0xff]
        %v2181 = vld [vmem:[%s841 + $0x8] sm:$0xff]
        %v2182 = vld [vmem:[%s846] sm:$0xff]
        %v2183 = vld [vmem:[%s846 + $0x8] sm:$0xff]
        %vm2184 = vcmp.ne.f32.partialorder %v2182, 0.0
        %vm2185 = vcmp.ne.f32.partialorder %v2183, 0.0
        %2187 = vset.pattern.permute.xlu0 0
        %2188 = vperm.xlu0 %2187, %v2180
        %v2189 = vpop.permute.xlu0 %2188
        %2192 = vset.pattern.permute.xlu0 0
        %2193 = vperm.xlu0 %2192, %v2181
        %v2194 = vpop.permute.xlu0 %2193
        %v2196 = vmul.f32 %v2148, %v2189
        %v2197 = vmul.f32 %v2151, %v2194
        %v2198 = vsel %vm2184, 1, 0
        %v2199 = vsel %vm2185, 1, 0
        %2200 = vset.pattern.permute.xlu0 0
        %2201 = vperm.xlu0 %2200, %v2198
        %v2202 = vpop.permute.xlu0 %2201
        %2203 = vset.pattern.permute.xlu0 0
        %2204 = vperm.xlu0 %2203, %v2199
        %v2205 = vpop.permute.xlu0 %2204
        %vm2206 = vcmp.eq.s32.totalorder %v2202, 1
        %vm2207 = vcmp.eq.s32.totalorder %v2205, 1
        %v2208 = vsel %vm2206, %v847, %v2196
        %v2209 = vsel %vm2207, %v848, %v2197
        %v2210 = vadd.f32 %v847, %v2208
        %v2211 = vadd.f32 %v848, %v2209
        %v2212 = vld [vmem:[%s12] sm:$0x1]
        %v2213 = vld [vmem:[%s13] sm:$0x1]
        %2214 = vadd.xlane.f32.xlu0 %v2210
        %v2215 = vpop.xlane.xlu0 %2214
        %2216 = vadd.xlane.f32.xlu0 %v2211
        %v2217 = vpop.xlane.xlu0 %2216
        %v2218 = vrcp.pop 128.0
        %v2219 = vmul.f32 128.0, %v2218
        %v2220 = vsub.f32 1.0, %v2219
        %v2221 = vmul.f32 %v2218, %v2220
        %v2222 = vadd.f32 %v2218, %v2221
        %vm2223 = vweird.f32 %v2218
        %v2224 = vsel %vm2223, %v2218, %v2222
        %v2225 = vmul.f32 %v2215, %v2224
        %v2226 = vmul.f32 %v2217, %v2224
        %v2227 = vsub.f32 %v2210, %v2225
        %v2228 = vsub.f32 %v2211, %v2226
        %v2229 = vmul.f32 %v2227, %v2227
        %v2230 = vmul.f32 %v2228, %v2228
        %2231 = vadd.xlane.f32.xlu0 %v2229
        %v2232 = vpop.xlane.xlu0 %2231
        %2233 = vadd.xlane.f32.xlu0 %v2230
        %v2234 = vpop.xlane.xlu0 %2233
        %v2235 = vmul.f32 %v2232, %v2224
        %v2236 = vmul.f32 %v2234, %v2224
        %v2237 = vadd.f32 %v2235, 1e-05
        %v2238 = vadd.f32 %v2236, 1e-05
        %v2239 = vrsqrt.pop %v2237
        %v2240 = vmul.f32 %v2239, %v2237
        %v2241 = vmul.f32 %v2240, %v2239
        %v2242 = vmul.f32 0.5, %v2241
        %v2243 = vsub.f32 1.5, %v2242
        %v2244 = vmul.f32 %v2239, %v2243
        %vm2245 = vweird.f32 %v2237
        %vm2246 = vweird.f32 %v2239
        %vm2247 = vmor %vm2245, %vm2246
        %v2248 = vsel %vm2247, %v2239, %v2244
        %v2249 = vrsqrt.pop %v2238
        %v2250 = vmul.f32 %v2249, %v2238
        %v2251 = vmul.f32 %v2250, %v2249
        %v2252 = vmul.f32 0.5, %v2251
        %v2253 = vsub.f32 1.5, %v2252
        %v2254 = vmul.f32 %v2249, %v2253
        %vm2255 = vweird.f32 %v2238
        %vm2256 = vweird.f32 %v2249
        %vm2257 = vmor %vm2255, %vm2256
        %v2258 = vsel %vm2257, %v2249, %v2254
        %v2259 = vmul.f32 %v2227, %v2248
        %v2260 = vmul.f32 %v2228, %v2258
        %v2262 = vperm.slane %v2212, 0
        %v2264 = vmul.f32 %v2259, %v2262
        %v2265 = vmul.f32 %v2260, %v2262
        %v2267 = vperm.slane %v2213, 0
        %v2269 = vadd.f32 %v2264, %v2267
        %v2270 = vadd.f32 %v2265, %v2267
        %v2271 = vmul.f32 %v2269, %v2189
        %v2272 = vmul.f32 %v2270, %v2194
        %v2273 = vsel %vm2206, %v847, %v2271
        %v2274 = vsel %vm2207, %v848, %v2272
        %v2275 = vld [vmem:[#allocation11] sm:$0xff]
        %v2276 = vld [vmem:[#allocation11 + $0x8] sm:$0xff]
        %v2277 = vld [vmem:[#allocation11 + $0x10] sm:$0xff]
        %v2278 = vld [vmem:[#allocation11 + $0x18] sm:$0xff]
        %v2279 = vld [vmem:[#allocation11 + $0x20] sm:$0xff]
        %v2280 = vld [vmem:[#allocation11 + $0x28] sm:$0xff]
        %v2281 = vld [vmem:[#allocation11 + $0x30] sm:$0xff]
        %v2282 = vld [vmem:[#allocation11 + $0x38] sm:$0xff]
        %v2283 = vld [vmem:[#allocation11 + $0x40] sm:$0xff]
        %v2284 = vld [vmem:[#allocation11 + $0x48] sm:$0xff]
        %v2285 = vld [vmem:[#allocation11 + $0x50] sm:$0xff]
        %v2286 = vld [vmem:[#allocation11 + $0x58] sm:$0xff]
        %v2287 = vld [vmem:[#allocation11 + $0x60] sm:$0xff]
        %v2288 = vld [vmem:[#allocation11 + $0x68] sm:$0xff]
        %v2289 = vld [vmem:[#allocation11 + $0x70] sm:$0xff]
        %v2290 = vld [vmem:[#allocation11 + $0x78] sm:$0xff]
        %v2291 = vld [vmem:[#allocation11 + $0x80] sm:$0xff]
        %v2292 = vld [vmem:[#allocation11 + $0x88] sm:$0xff]
        %v2293 = vld [vmem:[#allocation11 + $0x90] sm:$0xff]
        %v2294 = vld [vmem:[#allocation11 + $0x98] sm:$0xff]
        %v2295 = vld [vmem:[#allocation11 + $0xa0] sm:$0xff]
        %v2296 = vld [vmem:[#allocation11 + $0xa8] sm:$0xff]
        %v2297 = vld [vmem:[#allocation11 + $0xb0] sm:$0xff]
        %v2298 = vld [vmem:[#allocation11 + $0xb8] sm:$0xff]
        %v2299 = vld [vmem:[#allocation11 + $0xc0] sm:$0xff]
        %v2300 = vld [vmem:[#allocation11 + $0xc8] sm:$0xff]
        %v2301 = vld [vmem:[#allocation11 + $0xd0] sm:$0xff]
        %v2302 = vld [vmem:[#allocation11 + $0xd8] sm:$0xff]
        %v2303 = vld [vmem:[#allocation11 + $0xe0] sm:$0xff]
        %v2304 = vld [vmem:[#allocation11 + $0xe8] sm:$0xff]
        %v2305 = vld [vmem:[#allocation11 + $0xf0] sm:$0xff]
        %v2306 = vld [vmem:[#allocation11 + $0xf8] sm:$0xff]
        %v2307 = vld [vmem:[%s15] sm:$0x3]
        %v2309 = vperm.slane %v2307, 0
        %v2310 = vperm.slane %v2307, 1
        %2313 = vmatpush.msra.mxu0 %v2305
        %2314 = vmatpush.msra.mxu0 %v2303
        %2315 = vmatpush.msra.mxu0 %v2301
        %2316 = vmatpush.msra.mxu0 %v2299
        %2317 = vmatpush.msra.mxu0 %v2297
        %2318 = vmatpush.msra.mxu0 %v2295
        %2319 = vmatpush.msra.mxu0 %v2293
        %2320 = vmatpush.msra.mxu0 %v2291
        %2321 = vmatpush.msra.mxu0 %v2289
        %2322 = vmatpush.msra.mxu0 %v2287
        %2323 = vmatpush.msra.mxu0 %v2285
        %2324 = vmatpush.msra.mxu0 %v2283
        %2325 = vmatpush.msra.mxu0 %v2281
        %2326 = vmatpush.msra.mxu0 %v2279
        %2327 = vmatpush.msra.mxu0 %v2277
        %2328 = vmatpush.msra.mxu0 %v2275
        %2329 = vmatmul.f32.gmra.mxu0 %v2273
        %v2330 = vpop.f32.mrf.mxu0
        %v2331 = vadd.f32 %v2309, %v2330
        %2332 = vmatmul.f32.gmra.mxu0 %v2274
        %v2333 = vpop.f32.mrf.mxu0
        %v2334 = vadd.f32 %v2309, %v2333
        %2335 = vdwg.mxu0
        %2336 = vmatpush.msra.mxu0 %v2306
        %2337 = vmatpush.msra.mxu0 %v2304
        %2338 = vmatpush.msra.mxu0 %v2302
        %2339 = vmatpush.msra.mxu0 %v2300
        %2340 = vmatpush.msra.mxu0 %v2298
        %2341 = vmatpush.msra.mxu0 %v2296
        %2342 = vmatpush.msra.mxu0 %v2294
        %2343 = vmatpush.msra.mxu0 %v2292
        %2344 = vmatpush.msra.mxu0 %v2290
        %2345 = vmatpush.msra.mxu0 %v2288
        %2346 = vmatpush.msra.mxu0 %v2286
        %2347 = vmatpush.msra.mxu0 %v2284
        %2348 = vmatpush.msra.mxu0 %v2282
        %2349 = vmatpush.msra.mxu0 %v2280
        %2350 = vmatpush.msra.mxu0 %v2278
        %2351 = vmatpush.msra.mxu0 %v2276
        %2352 = vmatmul.f32.gmra.mxu0 %v2273
        %v2353 = vpop.f32.mrf.mxu0
        %v2354 = vadd.f32 %v2310, %v2353
        %2355 = vmatmul.f32.gmra.mxu0 %v2274
        %v2356 = vpop.f32.mrf.mxu0
        %v2357 = vadd.f32 %v2310, %v2356
        %2358 = vdwg.mxu0
        %v2359 = vmax.f32 %v2331, 0.0
        %v2360 = vmax.f32 %v2354, 0.0
        %v2361 = vmax.f32 %v2334, 0.0
        %v2362 = vmax.f32 %v2357, 0.0
        %v2363 = vld [vmem:[#allocation13] sm:$0xff]
        %v2364 = vld [vmem:[#allocation13 + $0x8] sm:$0xff]
        %v2365 = vld [vmem:[#allocation13 + $0x10] sm:$0xff]
        %v2366 = vld [vmem:[#allocation13 + $0x18] sm:$0xff]
        %v2367 = vld [vmem:[#allocation13 + $0x20] sm:$0xff]
        %v2368 = vld [vmem:[#allocation13 + $0x28] sm:$0xff]
        %v2369 = vld [vmem:[#allocation13 + $0x30] sm:$0xff]
        %v2370 = vld [vmem:[#allocation13 + $0x38] sm:$0xff]
        %v2371 = vld [vmem:[#allocation13 + $0x40] sm:$0xff]
        %v2372 = vld [vmem:[#allocation13 + $0x48] sm:$0xff]
        %v2373 = vld [vmem:[#allocation13 + $0x50] sm:$0xff]
        %v2374 = vld [vmem:[#allocation13 + $0x58] sm:$0xff]
        %v2375 = vld [vmem:[#allocation13 + $0x60] sm:$0xff]
        %v2376 = vld [vmem:[#allocation13 + $0x68] sm:$0xff]
        %v2377 = vld [vmem:[#allocation13 + $0x70] sm:$0xff]
        %v2378 = vld [vmem:[#allocation13 + $0x78] sm:$0xff]
        %v2379 = vld [vmem:[#allocation13 + $0x80] sm:$0xff]
        %v2380 = vld [vmem:[#allocation13 + $0x88] sm:$0xff]
        %v2381 = vld [vmem:[#allocation13 + $0x90] sm:$0xff]
        %v2382 = vld [vmem:[#allocation13 + $0x98] sm:$0xff]
        %v2383 = vld [vmem:[#allocation13 + $0xa0] sm:$0xff]
        %v2384 = vld [vmem:[#allocation13 + $0xa8] sm:$0xff]
        %v2385 = vld [vmem:[#allocation13 + $0xb0] sm:$0xff]
        %v2386 = vld [vmem:[#allocation13 + $0xb8] sm:$0xff]
        %v2387 = vld [vmem:[#allocation13 + $0xc0] sm:$0xff]
        %v2388 = vld [vmem:[#allocation13 + $0xc8] sm:$0xff]
        %v2389 = vld [vmem:[#allocation13 + $0xd0] sm:$0xff]
        %v2390 = vld [vmem:[#allocation13 + $0xd8] sm:$0xff]
        %v2391 = vld [vmem:[#allocation13 + $0xe0] sm:$0xff]
        %v2392 = vld [vmem:[#allocation13 + $0xe8] sm:$0xff]
        %v2393 = vld [vmem:[#allocation13 + $0xf0] sm:$0xff]
        %v2394 = vld [vmem:[#allocation13 + $0xf8] sm:$0xff]
        %v2395 = vld [vmem:[%s17] sm:$0x1]
        %v2397 = vperm.slane %v2395, 0
        %2399 = vmatpush.msra.mxu0 %v2378
        %2400 = vmatpush.msra.mxu0 %v2377
        %2401 = vmatpush.msra.mxu0 %v2376
        %2402 = vmatpush.msra.mxu0 %v2375
        %2403 = vmatpush.msra.mxu0 %v2374
        %2404 = vmatpush.msra.mxu0 %v2373
        %2405 = vmatpush.msra.mxu0 %v2372
        %2406 = vmatpush.msra.mxu0 %v2371
        %2407 = vmatpush.msra.mxu0 %v2370
        %2408 = vmatpush.msra.mxu0 %v2369
        %2409 = vmatpush.msra.mxu0 %v2368
        %2410 = vmatpush.msra.mxu0 %v2367
        %2411 = vmatpush.msra.mxu0 %v2366
        %2412 = vmatpush.msra.mxu0 %v2365
        %2413 = vmatpush.msra.mxu0 %v2364
        %2414 = vmatpush.msra.mxu0 %v2363
        %2415 = vmatmul.f32.gmra.mxu0 %v2359
        %v2416 = vpop.f32.mrf.mxu0
        %v2417 = vadd.f32 %v2397, %v2416
        %2418 = vmatmul.f32.gmra.mxu0 %v2361
        %v2419 = vpop.f32.mrf.mxu0
        %v2420 = vadd.f32 %v2397, %v2419
        %2421 = vdwg.mxu0
        %2422 = vmatpush.msra.mxu0 %v2394
        %2423 = vmatpush.msra.mxu0 %v2393
        %2424 = vmatpush.msra.mxu0 %v2392
        %2425 = vmatpush.msra.mxu0 %v2391
        %2426 = vmatpush.msra.mxu0 %v2390
        %2427 = vmatpush.msra.mxu0 %v2389
        %2428 = vmatpush.msra.mxu0 %v2388
        %2429 = vmatpush.msra.mxu0 %v2387
        %2430 = vmatpush.msra.mxu0 %v2386
        %2431 = vmatpush.msra.mxu0 %v2385
        %2432 = vmatpush.msra.mxu0 %v2384
        %2433 = vmatpush.msra.mxu0 %v2383
        %2434 = vmatpush.msra.mxu0 %v2382
        %2435 = vmatpush.msra.mxu0 %v2381
        %2436 = vmatpush.msra.mxu0 %v2380
        %2437 = vmatpush.msra.mxu0 %v2379
        %2438 = vmatmul.f32.gmra.mxu0 %v2360
        %v2439 = vpop.f32.mrf.mxu0
        %v2440 = vadd.f32 %v2417, %v2439
        %2441 = vmatmul.f32.gmra.mxu0 %v2362
        %v2442 = vpop.f32.mrf.mxu0
        %v2443 = vadd.f32 %v2420, %v2442
        %2444 = vdwg.mxu0
        %v2445 = vadd.f32 %v2273, %v2440
        %v2446 = vadd.f32 %v2274, %v2443
        %v2447 = vld [vmem:[%s18] sm:$0x1]
        %v2448 = vld [vmem:[%s19] sm:$0x1]
        %2449 = vadd.xlane.f32.xlu0 %v2445
        %v2450 = vpop.xlane.xlu0 %2449
        %2451 = vadd.xlane.f32.xlu0 %v2446
        %v2452 = vpop.xlane.xlu0 %2451
        %v2453 = vmul.f32 %v2450, %v2224
        %v2454 = vmul.f32 %v2452, %v2224
        %v2455 = vsub.f32 %v2445, %v2453
        %v2456 = vsub.f32 %v2446, %v2454
        %v2457 = vmul.f32 %v2455, %v2455
        %v2458 = vmul.f32 %v2456, %v2456
        %2459 = vadd.xlane.f32.xlu0 %v2457
        %v2460 = vpop.xlane.xlu0 %2459
        %2461 = vadd.xlane.f32.xlu0 %v2458
        %v2462 = vpop.xlane.xlu0 %2461
        %v2463 = vmul.f32 %v2460, %v2224
        %v2464 = vmul.f32 %v2462, %v2224
        %v2465 = vadd.f32 %v2463, 1e-05
        %v2466 = vadd.f32 %v2464, 1e-05
        %v2467 = vrsqrt.pop %v2465
        %v2468 = vmul.f32 %v2467, %v2465
        %v2469 = vmul.f32 %v2468, %v2467
        %v2470 = vmul.f32 0.5, %v2469
        %v2471 = vsub.f32 1.5, %v2470
        %v2472 = vmul.f32 %v2467, %v2471
        %vm2473 = vweird.f32 %v2465
        %vm2474 = vweird.f32 %v2467
        %vm2475 = vmor %vm2473, %vm2474
        %v2476 = vsel %vm2475, %v2467, %v2472
        %v2477 = vrsqrt.pop %v2466
        %v2478 = vmul.f32 %v2477, %v2466
        %v2479 = vmul.f32 %v2478, %v2477
        %v2480 = vmul.f32 0.5, %v2479
        %v2481 = vsub.f32 1.5, %v2480
        %v2482 = vmul.f32 %v2477, %v2481
        %vm2483 = vweird.f32 %v2466
        %vm2484 = vweird.f32 %v2477
        %vm2485 = vmor %vm2483, %vm2484
        %v2486 = vsel %vm2485, %v2477, %v2482
        %v2487 = vmul.f32 %v2455, %v2476
        %v2488 = vmul.f32 %v2456, %v2486
        %v2490 = vperm.slane %v2447, 0
        %v2492 = vmul.f32 %v2487, %v2490
        %v2493 = vmul.f32 %v2488, %v2490
        %v2495 = vperm.slane %v2448, 0
        %v2497 = vadd.f32 %v2492, %v2495
        %v2498 = vadd.f32 %v2493, %v2495
        %v2499 = vmul.f32 %v2497, %v2189
        %v2500 = vmul.f32 %v2498, %v2194
        %v2501 = vsel %vm2206, %v847, %v2499
        %v2502 = vsel %vm2207, %v848, %v2500
        %2503 = vst [vmem:[%s824] sm:$0xff] %v2501
        %2504 = vst [vmem:[%s824 + $0x8] sm:$0xff] %v2502
        %s2505 = sand.u32 %s493, 1
        %s2506 = scalar_lea.sflag [#allocation4], %s2505
        %s2507 = sand.u32 %s493, 1
        %s2508 = smul.addr %s2507, 16
        %s2509 = scalar_lea.vmem [#allocation14], %s2508
        %s2510 = sand.u32 %s519, 1
        %s2511 = scalar_lea.sflag [#allocation16], %s2510
        %s2512 = sand.u32 %s519, 1
        %s2513 = smul.addr %s2512, 16
        %s2514 = scalar_lea.vmem [#allocation15], %s2513
        // Predicated region
        $region129: #{tpu_custom_call.1} parent=99 // pred_check
          %p2515 = pneg %p503
        $region130: #{tpu_custom_call.1} parent=99 // pred_check_branch
          %2517 = sbr.rel (%p2515) target = $region132
        $region131: #{tpu_custom_call.1} parent=99 // pred_region
          %2519 = vsyncadd %s2506, 0
          %s2520 = smul.addr %s45, 2
          %s2521 = smul.addr %s2520, 8
          %s2522 = scalar_lea.hbm %s20, %s2521
          %s2523 = sshll.u32 %s2509, 4
          %s2524 = int_to_ptr.vmem [resolvable:$true] %s2523
          %s2525 = sshll.u32 %s2522, 4
          %s2526 = int_to_ptr.hbm [resolvable:$true] %s2525
          %2531 = dma.vmem_to_hbm [thread:$0]  %s2524, 256, %s2526, %s2506, 128, 128, 8
        $region132: #{tpu_custom_call.1} parent=99 // pred_fallthru
          _
        // Predicated region
        $region133: #{tpu_custom_call.1} parent=99 // pred_check
          %p2532 = pneg %p529
        $region134: #{tpu_custom_call.1} parent=99 // pred_check_branch
          %2534 = sbr.rel (%p2532) target = $region136
        $region135: #{tpu_custom_call.1} parent=99 // pred_region
          %2536 = vsyncadd %s2511, 0
          %s2537 = smul.addr %s45, 2
          %s2538 = smul.addr %s2537, 8
          %s2539 = scalar_lea.hbm %s21, %s2538
          %s2540 = sshll.u32 %s2514, 4
          %s2541 = int_to_ptr.vmem [resolvable:$true] %s2540
          %s2542 = sshll.u32 %s2539, 4
          %s2543 = int_to_ptr.hbm [resolvable:$true] %s2542
          %2548 = dma.vmem_to_hbm [thread:$0]  %s2541, 256, %s2543, %s2511, 128, 128, 8
        $region136: #{tpu_custom_call.1} parent=99 // pred_fallthru
          _
      $region100: #{tpu_custom_call.1} parent=5 // pred_fallthru
        _
      %p2549 = scmp.le.s32.totalorder 2, %s40
      // Predicated region
      $region137: #{tpu_custom_call.1} parent=5 // pred_check
        %p2550 = pneg %p2549
      $region138: #{tpu_custom_call.1} parent=5 // pred_check_branch
        %2552 = sbr.rel (%p2550) target = $region140
      $region139: #{tpu_custom_call.1} parent=5 // pred_region
        %s2553 = ssub.s32 %s40, 2
        // Predicated region
        $region141: #{tpu_custom_call.1} parent=139 // pred_check
          %p2554 = pneg %p509
        $region142: #{tpu_custom_call.1} parent=139 // pred_check_branch
          %2556 = sbr.rel (%p2554) target = $region144
        $region143: #{tpu_custom_call.1} parent=139 // pred_region
          %s2557 = sand.u32 %s494, 1
          %s2558 = scalar_lea.sflag [#allocation4], %s2557
          %s2559 = sand.u32 %s494, 1
          %s2560 = smul.addr %s2559, 16
          %s2561 = scalar_lea.vmem [#allocation14], %s2560
          %2563 = dma.done %s2558, 256
        $region144: #{tpu_custom_call.1} parent=139 // pred_fallthru
          _
        // Predicated region
        $region145: #{tpu_custom_call.1} parent=139 // pred_check
          %p2564 = pneg %p535
        $region146: #{tpu_custom_call.1} parent=139 // pred_check_branch
          %2566 = sbr.rel (%p2564) target = $region148
        $region147: #{tpu_custom_call.1} parent=139 // pred_region
          %s2567 = sand.u32 %s520, 1
          %s2568 = scalar_lea.sflag [#allocation16], %s2567
          %s2569 = sand.u32 %s520, 1
          %s2570 = smul.addr %s2569, 16
          %s2571 = scalar_lea.vmem [#allocation15], %s2570
          %2573 = dma.done %s2568, 256
        $region148: #{tpu_custom_call.1} parent=139 // pred_fallthru
          _
      $region140: #{tpu_custom_call.1} parent=5 // pred_fallthru
        _
    $region6: #{tpu_custom_call.1} parent=1 // loop_footer
      %s44 = sadd.s32 1, %s40
    $region7: #{tpu_custom_call.1} parent=1 // loop_footer_branch
      %39 = sbr.rel target = $region3
    $region8: #{tpu_custom_call.1} parent=1 // loop_exit
      _
    %2574 = vsyncpa [#allocation3], 1
    %s2575 = scalar_lea.sflag [#allocation3], 1
    %2576 = vsyncpa %s2575, 1
    %2577 = vsyncpa [#allocation6], 1
    %2578 = vsyncpa [#allocation9], 1
    %2579 = vsyncpa [#allocation12], 1
    %2580 = vsyncpa [#allocation4], 1
    %s2581 = scalar_lea.sflag [#allocation4], 1
    %2582 = vsyncpa %s2581, 1
    %2583 = vsyncpa [#allocation16], 1
    %s2584 = scalar_lea.sflag [#allocation16], 1
    %2585 = vsyncpa %s2584, 1

</llo_original>
